<compile_context>
chip_gen: v5e
topology: v5e:2x2
jax: 0.10.0
libtpu: 0.0.40
codegen_flags: <defaults>
</compile_context>

<pallas_src>
import math

import jax
import jax.numpy as jnp
from jax.experimental import pallas as pl
from jax.experimental.pallas import tpu as pltpu


# ----------------------------------------------------------------------------
# Pallas kernel: layer-0 GRU recurrence, per-gate lane-aligned projections.
# ----------------------------------------------------------------------------
def gru_layer0_kernel(feats_ref,    # (T*Bp, D)  f32, VMEM (time-major, batch padded)
                      lens_ref,     # (Bp, 1)    i32, VMEM (padded rows have length 0)
                      wih_ref,      # (3, D, H)  f32  [W_ir | W_iz | W_in]
                      whh_ref,      # (3, H, H)  f32  [W_hr | W_hz | W_hn]
                      bih_ref,      # (3, 1, H)  f32  [b_ir+b_hr | b_iz+b_hz | b_in]
                      bhn_ref,      # (1, H)     f32  b_hn
                      h_out_ref):   # (Bp, H)    f32
    TBp, _ = feats_ref.shape
    Bp = lens_ref.shape[0]
    T = TBp // Bp
    H = h_out_ref.shape[-1]

    feats = feats_ref[...]

    # Hoisted input projection, one matmul per gate so every gate result lands
    # at lane 0 with width H (no per-step lane realignment).  The fused
    # (input + recurrent) r/z biases and the input-side n bias are added here,
    # once, above the recurrence.
    # TODO(synk): on v6e/v7x at larger D/H/T, cast feats/wih to bf16 for these
    # MXU operands (keep preferred_element_type=f32 and the h carry in f32).
    gi_r = jnp.dot(feats, wih_ref[0], preferred_element_type=jnp.float32) + bih_ref[0]
    gi_z = jnp.dot(feats, wih_ref[1], preferred_element_type=jnp.float32) + bih_ref[1]
    gi_n = jnp.dot(feats, wih_ref[2], preferred_element_type=jnp.float32) + bih_ref[2]

    # Loop-invariant recurrent weights: load once, keep resident.
    whh_r = whh_ref[0]
    whh_z = whh_ref[1]
    whh_n = whh_ref[2]
    # Hoisted b_hn broadcast (the static unroll would otherwise re-emit it T times).
    bhn = jnp.broadcast_to(bhn_ref[...], (Bp, H))

    # Hoisted validity predicates (PackedSequence: freeze h once t >= len[b]).
    # One int broadcast + T compares above the loop; only a vsel remains per step.
    lens_b = jnp.broadcast_to(lens_ref[...], (Bp, H))          # (Bp, H) int32
    masks = [(t < lens_b) for t in range(T)]                   # T x (Bp, H) bool

    h = jnp.zeros((Bp, H), jnp.float32)

    # Static unroll over time (T small & static): full scheduler visibility,
    # no per-iteration loop overhead.  The recurrence is strictly serial.
    for t in range(T):
        # Per-gate recurrent projection: three (Bp,H)x(H,H) pushes, each gate
        # lane-0 aligned — no cross-lane slicing on the critical path.
        gh_r = jnp.dot(h, whh_r, preferred_element_type=jnp.float32)
        gh_z = jnp.dot(h, whh_z, preferred_element_type=jnp.float32)
        gh_n = jnp.dot(h, whh_n, preferred_element_type=jnp.float32)

        lo, hi = t * Bp, (t + 1) * Bp                          # sublane-aligned slice
        # PyTorch GRU cell, gate order (r, z, n):
        #   r = sigmoid(x W_ir + b_ir + h W_hr + b_hr)
        #   z = sigmoid(x W_iz + b_iz + h W_hz + b_hz)
        #   n = tanh   (x W_in + b_in + r * (h W_hn + b_hn))
        #   h' = (1 - z) * n + z * h
        r = jax.nn.sigmoid(gi_r[lo:hi, :] + gh_r)
        z = jax.nn.sigmoid(gi_z[lo:hi, :] + gh_z)
        n = jnp.tanh(gi_n[lo:hi, :] + r * (gh_n + bhn))
        h_new = n + z * (h - n)                                # == (1-z)*n + z*h

        h = jnp.where(masks[t], h_new, h)                      # single vsel per step

    h_out_ref[...] = h


# ----------------------------------------------------------------------------
# Wrapper: parameter fusion, layout plumbing, pallas_call.
# ----------------------------------------------------------------------------
@jax.jit
def gru_layer0_final(feats, seq_lengths, params):
    """feats: (B, T, D) f32, seq_lengths: (B,) int.  Returns layer-0 final hidden (B, H)."""
    B, T, D = feats.shape
    H = params["wih0"].shape[-1]
    Bp = ((B + 7) // 8) * 8  # pad batch to one sublane group for aligned slices

    wih = params["wih0"]                                   # (3, D, H)
    whh = params["whh0"]                                   # (3, H, H)
    b_ih, b_hh = params["bih0"], params["bhh0"]            # each (3, 1, H)
    # Fuse r/z recurrent biases into the input-side biases; only b_hn stays
    # on the recurrent side (needed inside r * (h @ W_hn + b_hn)).
    bih_f = jnp.stack([b_ih[0] + b_hh[0], b_ih[1] + b_hh[1], b_ih[2]], axis=0)  # (3,1,H)
    bhn = b_hh[2]                                          # (1, H)

    # Time-major, batch-padded, flattened to (T*Bp, D) for the hoisted matmuls.
    # TODO(synk): for large T*B*D, stream feats via a time-axis BlockSpec grid
    # (t marked "arbitrary", h carried in VMEM scratch, feats kept in HBM) and
    # add a batch "parallel" grid axis for v7x's two TensorCores when Bp >= 16,
    # instead of materializing this transpose/pad through HBM.
    feats_tm = jnp.transpose(feats.astype(jnp.float32), (1, 0, 2))        # (T, B, D)
    feats_tm = jnp.pad(feats_tm, ((0, 0), (0, Bp - B), (0, 0)))           # (T, Bp, D)
    feats_2d = feats_tm.reshape(T * Bp, D)

    # Compact per-batch lengths column (padded rows get length 0 -> stay zero).
    lens_col = jnp.pad(seq_lengths.astype(jnp.int32), (0, Bp - B))[:, None]  # (Bp, 1)

    vmem_specs = [pl.BlockSpec(memory_space=pltpu.MemorySpace.VMEM) for _ in range(6)]

    h0 = pl.pallas_call(
        gru_layer0_kernel,
        out_shape=jax.ShapeDtypeStruct((Bp, H), jnp.float32),
        in_specs=vmem_specs,
        out_specs=pl.BlockSpec(memory_space=pltpu.MemorySpace.VMEM),
    )(feats_2d, lens_col, wih, whh, bih_f, bhn)

    return h0[:B]


def lstm_module_forward(feats, seq_lengths, params):
    """Exact equivalent of LSTM.forward: returns h[0] = h_n[0][0], shape (H,).

    Layer-1 (and its inter-layer dropout) never affects h_n[0], so it is not computed.
    """
    return gru_layer0_final(feats, seq_lengths, params)[0]


# ----------------------------------------------------------------------------
# Deterministic parameter init (matches shapes of nn.GRU(D, H, num_layers=2)
# after init_ortho: 2-D weights orthogonal, biases uniform(-1/sqrt(H), 1/sqrt(H)))
# ----------------------------------------------------------------------------
def init_params(key, input_dim, hidden):
    ortho = jax.nn.initializers.orthogonal()
    keys = jax.random.split(key, 8)
    bound = 1.0 / math.sqrt(hidden)

    def prep_w(k, in_dim):
        # torch weight: (3H, in_dim), gate order r,z,n  ->  (3, in_dim, H)
        w = ortho(k, (3 * hidden, in_dim), jnp.float32)
        return jnp.transpose(w.reshape(3, hidden, in_dim), (0, 2, 1))

    def prep_b(k):
        b = jax.random.uniform(k, (3 * hidden,), jnp.float32, -bound, bound)
        return b.reshape(3, 1, hidden)

    return {
        "wih0": prep_w(keys[0], input_dim),
        "whh0": prep_w(keys[1], hidden),
        "bih0": prep_b(keys[2]),
        "bhh0": prep_b(keys[3]),
        # Layer-1 parameters exist in the module but do not influence the
        # returned value h_n[0][0]; kept here only for the reference check.
        "wih1": prep_w(keys[4], hidden),
        "whh1": prep_w(keys[5], hidden),
        "bih1": prep_b(keys[6]),
        "bhh1": prep_b(keys[7]),
    }


# ----------------------------------------------------------------------------
# Pure-JAX reference (full 2-layer GRU + packed-sequence masking) for checking.
# ----------------------------------------------------------------------------
def ref_h_n(feats, seq_lengths, params):
    B, T, D = feats.shape
    H = params["wih0"].shape[-1]

    def cell(x, h, wih, whh, bih, bhh):
        r = jax.nn.sigmoid(x @ wih[0] + bih[0] + h @ whh[0] + bhh[0])
        z = jax.nn.sigmoid(x @ wih[1] + bih[1] + h @ whh[1] + bhh[1])
        n = jnp.tanh(x @ wih[2] + bih[2] + r * (h @ whh[2] + bhh[2]))
        return (1.0 - z) * n + z * h

    h0 = jnp.zeros((B, H), jnp.float32)
    h1 = jnp.zeros((B, H), jnp.float32)
    for t in range(T):
        x_t = feats[:, t, :]
        h0n = cell(x_t, h0, params["wih0"], params["whh0"], params["bih0"], params["bhh0"])
        h1n = cell(h0n, h1, params["wih1"], params["whh1"], params["bih1"], params["bhh1"])
        valid = (t < seq_lengths).reshape(B, 1)
        h0 = jnp.where(valid, h0n, h0)
        h1 = jnp.where(valid, h1n, h1)
    return jnp.stack([h0, h1], axis=0)


if __name__ == "__main__":
    # config: embed_dim=28, mask_dim=4 -> input dim D=32; l_hidden_size=32
    B, T, D, H = 2, 8, 32, 32

    key = jax.random.PRNGKey(0)
    k_feat, k_param = jax.random.split(key)

    feats = jax.random.normal(k_feat, (B, T, D), jnp.float32)
    # pack_padded_sequence requires lengths sorted in decreasing order
    seq_lengths = jnp.array([8, 5], dtype=jnp.int32)
    params = init_params(k_param, D, H)

    # Kernel result: layer-0 final hidden for all batch rows, and module output.
    h0_kernel = gru_layer0_final(feats, seq_lengths, params)   # (B, H)
    out = lstm_module_forward(feats, seq_lengths, params)      # (H,)
    jax.block_until_ready(out)

    ref = ref_h_n(feats, seq_lengths, params)                  # (2, B, H)
    assert out.shape == (H,)
    assert jnp.allclose(h0_kernel, ref[0], atol=1e-3, rtol=1e-3)
    assert jnp.allclose(out, ref[0][0], atol=1e-3, rtol=1e-3)

    print("KERNEL_OK")
</pallas_src>

<mosaic_0001>
module attributes {stable_mosaic.version = 11 : i64} {
  func.func @gru_layer0_kernel(%arg0: memref<64x32xf32, #tpu.memory_space<vmem>>, %arg1: memref<8x1xi32, #tpu.memory_space<vmem>>, %arg2: memref<3x32x32xf32, #tpu.memory_space<vmem>>, %arg3: memref<3x32x32xf32, #tpu.memory_space<vmem>>, %arg4: memref<3x1x32xf32, #tpu.memory_space<vmem>>, %arg5: memref<1x32xf32, #tpu.memory_space<vmem>>, %arg6: memref<8x32xf32, #tpu.memory_space<vmem>>) attributes {dimension_semantics = [], scalar_prefetch = 0 : i64, scratch_operands = 0 : i64, tpu.core_type = #tpu.core_type<tc>} {
    %c0 = arith.constant 0 : index
    %c0_0 = arith.constant 0 : index
    %0 = vector.load %arg0[%c0, %c0_0] : memref<64x32xf32, #tpu.memory_space<vmem>>, vector<64x32xf32>
    %c0_1 = arith.constant 0 : index
    %c0_2 = arith.constant 0 : index
    %c0_3 = arith.constant 0 : index
    %1 = vector.load %arg2[%c0_1, %c0_2, %c0_3] : memref<3x32x32xf32, #tpu.memory_space<vmem>>, vector<1x32x32xf32>
    %2 = vector.shape_cast %1 : vector<1x32x32xf32> to vector<32x32xf32>
    %cst = arith.constant dense<0.000000e+00> : vector<64x32xf32>
    %3 = tpu.matmul %0, %2, %cst {dimension_numbers = #tpu.dot_dimension_numbers<[1], [0], [0], [1], [0, 0, 1, 1], [], []>} : vector<64x32xf32>, vector<32x32xf32>, vector<64x32xf32> -> vector<64x32xf32>
    %c0_4 = arith.constant 0 : index
    %c0_5 = arith.constant 0 : index
    %c0_6 = arith.constant 0 : index
    %4 = vector.load %arg4[%c0_4, %c0_5, %c0_6] : memref<3x1x32xf32, #tpu.memory_space<vmem>>, vector<1x1x32xf32>
    %5 = vector.shape_cast %4 : vector<1x1x32xf32> to vector<1x32xf32>
    %6 = vector.broadcast %5 : vector<1x32xf32> to vector<64x32xf32>
    %7 = arith.addf %3, %6 : vector<64x32xf32>
    %c1 = arith.constant 1 : index
    %c0_7 = arith.constant 0 : index
    %c0_8 = arith.constant 0 : index
    %8 = vector.load %arg2[%c1, %c0_7, %c0_8] : memref<3x32x32xf32, #tpu.memory_space<vmem>>, vector<1x32x32xf32>
    %9 = vector.shape_cast %8 : vector<1x32x32xf32> to vector<32x32xf32>
    %cst_9 = arith.constant dense<0.000000e+00> : vector<64x32xf32>
    %10 = tpu.matmul %0, %9, %cst_9 {dimension_numbers = #tpu.dot_dimension_numbers<[1], [0], [0], [1], [0, 0, 1, 1], [], []>} : vector<64x32xf32>, vector<32x32xf32>, vector<64x32xf32> -> vector<64x32xf32>
    %c1_10 = arith.constant 1 : index
    %c0_11 = arith.constant 0 : index
    %c0_12 = arith.constant 0 : index
    %11 = vector.load %arg4[%c1_10, %c0_11, %c0_12] : memref<3x1x32xf32, #tpu.memory_space<vmem>>, vector<1x1x32xf32>
    %12 = vector.shape_cast %11 : vector<1x1x32xf32> to vector<1x32xf32>
    %13 = vector.broadcast %12 : vector<1x32xf32> to vector<64x32xf32>
    %14 = arith.addf %10, %13 : vector<64x32xf32>
    %c2 = arith.constant 2 : index
    %c0_13 = arith.constant 0 : index
    %c0_14 = arith.constant 0 : index
    %15 = vector.load %arg2[%c2, %c0_13, %c0_14] : memref<3x32x32xf32, #tpu.memory_space<vmem>>, vector<1x32x32xf32>
    %16 = vector.shape_cast %15 : vector<1x32x32xf32> to vector<32x32xf32>
    %cst_15 = arith.constant dense<0.000000e+00> : vector<64x32xf32>
    %17 = tpu.matmul %0, %16, %cst_15 {dimension_numbers = #tpu.dot_dimension_numbers<[1], [0], [0], [1], [0, 0, 1, 1], [], []>} : vector<64x32xf32>, vector<32x32xf32>, vector<64x32xf32> -> vector<64x32xf32>
    %c2_16 = arith.constant 2 : index
    %c0_17 = arith.constant 0 : index
    %c0_18 = arith.constant 0 : index
    %18 = vector.load %arg4[%c2_16, %c0_17, %c0_18] : memref<3x1x32xf32, #tpu.memory_space<vmem>>, vector<1x1x32xf32>
    %19 = vector.shape_cast %18 : vector<1x1x32xf32> to vector<1x32xf32>
    %20 = vector.broadcast %19 : vector<1x32xf32> to vector<64x32xf32>
    %21 = arith.addf %17, %20 : vector<64x32xf32>
    %c0_19 = arith.constant 0 : index
    %c0_20 = arith.constant 0 : index
    %c0_21 = arith.constant 0 : index
    %22 = vector.load %arg3[%c0_19, %c0_20, %c0_21] : memref<3x32x32xf32, #tpu.memory_space<vmem>>, vector<1x32x32xf32>
    %23 = vector.shape_cast %22 : vector<1x32x32xf32> to vector<32x32xf32>
    %c1_22 = arith.constant 1 : index
    %c0_23 = arith.constant 0 : index
    %c0_24 = arith.constant 0 : index
    %24 = vector.load %arg3[%c1_22, %c0_23, %c0_24] : memref<3x32x32xf32, #tpu.memory_space<vmem>>, vector<1x32x32xf32>
    %25 = vector.shape_cast %24 : vector<1x32x32xf32> to vector<32x32xf32>
    %c2_25 = arith.constant 2 : index
    %c0_26 = arith.constant 0 : index
    %c0_27 = arith.constant 0 : index
    %26 = vector.load %arg3[%c2_25, %c0_26, %c0_27] : memref<3x32x32xf32, #tpu.memory_space<vmem>>, vector<1x32x32xf32>
    %27 = vector.shape_cast %26 : vector<1x32x32xf32> to vector<32x32xf32>
    %c0_28 = arith.constant 0 : index
    %c0_29 = arith.constant 0 : index
    %28 = vector.load %arg5[%c0_28, %c0_29] : memref<1x32xf32, #tpu.memory_space<vmem>>, vector<1x32xf32>
    %29 = vector.shape_cast %28 : vector<1x32xf32> to vector<1x32xf32>
    %30 = vector.broadcast %29 : vector<1x32xf32> to vector<8x32xf32>
    %c0_30 = arith.constant 0 : index
    %c0_31 = arith.constant 0 : index
    %31 = vector.load %arg1[%c0_30, %c0_31] : memref<8x1xi32, #tpu.memory_space<vmem>>, vector<8x1xi32>
    %32 = vector.shape_cast %31 : vector<8x1xi32> to vector<8x1xi32>
    %33 = vector.broadcast %32 : vector<8x1xi32> to vector<8x32xi32>
    %c0_i32 = arith.constant 0 : i32
    %34 = vector.broadcast %c0_i32 : i32 to vector<8x32xi32>
    %35 = arith.cmpi sgt, %33, %34 : vector<8x32xi32>
    %c1_i32 = arith.constant 1 : i32
    %36 = vector.broadcast %c1_i32 : i32 to vector<8x32xi32>
    %37 = arith.cmpi sgt, %33, %36 : vector<8x32xi32>
    %c2_i32 = arith.constant 2 : i32
    %38 = vector.broadcast %c2_i32 : i32 to vector<8x32xi32>
    %39 = arith.cmpi sgt, %33, %38 : vector<8x32xi32>
    %c3_i32 = arith.constant 3 : i32
    %40 = vector.broadcast %c3_i32 : i32 to vector<8x32xi32>
    %41 = arith.cmpi sgt, %33, %40 : vector<8x32xi32>
    %c4_i32 = arith.constant 4 : i32
    %42 = vector.broadcast %c4_i32 : i32 to vector<8x32xi32>
    %43 = arith.cmpi sgt, %33, %42 : vector<8x32xi32>
    %c5_i32 = arith.constant 5 : i32
    %44 = vector.broadcast %c5_i32 : i32 to vector<8x32xi32>
    %45 = arith.cmpi sgt, %33, %44 : vector<8x32xi32>
    %c6_i32 = arith.constant 6 : i32
    %46 = vector.broadcast %c6_i32 : i32 to vector<8x32xi32>
    %47 = arith.cmpi sgt, %33, %46 : vector<8x32xi32>
    %c7_i32 = arith.constant 7 : i32
    %48 = vector.broadcast %c7_i32 : i32 to vector<8x32xi32>
    %49 = arith.cmpi sgt, %33, %48 : vector<8x32xi32>
    %cst_32 = arith.constant 0.000000e+00 : f32
    %50 = vector.broadcast %cst_32 : f32 to vector<8x32xf32>
    %cst_33 = arith.constant dense<0.000000e+00> : vector<8x32xf32>
    %51 = tpu.matmul %50, %23, %cst_33 {dimension_numbers = #tpu.dot_dimension_numbers<[1], [0], [0], [1], [0, 0, 1, 1], [], []>} : vector<8x32xf32>, vector<32x32xf32>, vector<8x32xf32> -> vector<8x32xf32>
    %cst_34 = arith.constant dense<0.000000e+00> : vector<8x32xf32>
    %52 = tpu.matmul %50, %25, %cst_34 {dimension_numbers = #tpu.dot_dimension_numbers<[1], [0], [0], [1], [0, 0, 1, 1], [], []>} : vector<8x32xf32>, vector<32x32xf32>, vector<8x32xf32> -> vector<8x32xf32>
    %cst_35 = arith.constant dense<0.000000e+00> : vector<8x32xf32>
    %53 = tpu.matmul %50, %27, %cst_35 {dimension_numbers = #tpu.dot_dimension_numbers<[1], [0], [0], [1], [0, 0, 1, 1], [], []>} : vector<8x32xf32>, vector<32x32xf32>, vector<8x32xf32> -> vector<8x32xf32>
    %54 = vector.extract_strided_slice %7 {offsets = [0, 0], sizes = [8, 32], strides = [1, 1]} : vector<64x32xf32> to vector<8x32xf32>
    %55 = arith.addf %54, %51 : vector<8x32xf32>
    %56 = arith.negf %55 : vector<8x32xf32>
    %57 = math.exp %56 : vector<8x32xf32>
    %cst_36 = arith.constant 1.000000e+00 : f32
    %58 = vector.broadcast %cst_36 : f32 to vector<8x32xf32>
    %59 = arith.addf %58, %57 : vector<8x32xf32>
    %60 = arith.divf %58, %59 : vector<8x32xf32>
    %61 = vector.extract_strided_slice %14 {offsets = [0, 0], sizes = [8, 32], strides = [1, 1]} : vector<64x32xf32> to vector<8x32xf32>
    %62 = arith.addf %61, %52 : vector<8x32xf32>
    %63 = arith.negf %62 : vector<8x32xf32>
    %64 = math.exp %63 : vector<8x32xf32>
    %cst_37 = arith.constant 1.000000e+00 : f32
    %65 = vector.broadcast %cst_37 : f32 to vector<8x32xf32>
    %66 = arith.addf %65, %64 : vector<8x32xf32>
    %67 = arith.divf %65, %66 : vector<8x32xf32>
    %68 = vector.extract_strided_slice %21 {offsets = [0, 0], sizes = [8, 32], strides = [1, 1]} : vector<64x32xf32> to vector<8x32xf32>
    %69 = arith.addf %53, %30 : vector<8x32xf32>
    %70 = arith.mulf %60, %69 : vector<8x32xf32>
    %71 = arith.addf %68, %70 : vector<8x32xf32>
    %72 = math.tanh %71 : vector<8x32xf32>
    %73 = arith.subf %50, %72 : vector<8x32xf32>
    %74 = arith.mulf %67, %73 : vector<8x32xf32>
    %75 = arith.addf %72, %74 : vector<8x32xf32>
    %76 = arith.select %35, %75, %50 : vector<8x32xi1>, vector<8x32xf32>
    %cst_38 = arith.constant dense<0.000000e+00> : vector<8x32xf32>
    %77 = tpu.matmul %76, %23, %cst_38 {dimension_numbers = #tpu.dot_dimension_numbers<[1], [0], [0], [1], [0, 0, 1, 1], [], []>} : vector<8x32xf32>, vector<32x32xf32>, vector<8x32xf32> -> vector<8x32xf32>
    %cst_39 = arith.constant dense<0.000000e+00> : vector<8x32xf32>
    %78 = tpu.matmul %76, %25, %cst_39 {dimension_numbers = #tpu.dot_dimension_numbers<[1], [0], [0], [1], [0, 0, 1, 1], [], []>} : vector<8x32xf32>, vector<32x32xf32>, vector<8x32xf32> -> vector<8x32xf32>
    %cst_40 = arith.constant dense<0.000000e+00> : vector<8x32xf32>
    %79 = tpu.matmul %76, %27, %cst_40 {dimension_numbers = #tpu.dot_dimension_numbers<[1], [0], [0], [1], [0, 0, 1, 1], [], []>} : vector<8x32xf32>, vector<32x32xf32>, vector<8x32xf32> -> vector<8x32xf32>
    %80 = vector.extract_strided_slice %7 {offsets = [8, 0], sizes = [8, 32], strides = [1, 1]} : vector<64x32xf32> to vector<8x32xf32>
    %81 = arith.addf %80, %77 : vector<8x32xf32>
    %82 = arith.negf %81 : vector<8x32xf32>
    %83 = math.exp %82 : vector<8x32xf32>
    %cst_41 = arith.constant 1.000000e+00 : f32
    %84 = vector.broadcast %cst_41 : f32 to vector<8x32xf32>
    %85 = arith.addf %84, %83 : vector<8x32xf32>
    %86 = arith.divf %84, %85 : vector<8x32xf32>
    %87 = vector.extract_strided_slice %14 {offsets = [8, 0], sizes = [8, 32], strides = [1, 1]} : vector<64x32xf32> to vector<8x32xf32>
    %88 = arith.addf %87, %78 : vector<8x32xf32>
    %89 = arith.negf %88 : vector<8x32xf32>
    %90 = math.exp %89 : vector<8x32xf32>
    %cst_42 = arith.constant 1.000000e+00 : f32
    %91 = vector.broadcast %cst_42 : f32 to vector<8x32xf32>
    %92 = arith.addf %91, %90 : vector<8x32xf32>
    %93 = arith.divf %91, %92 : vector<8x32xf32>
    %94 = vector.extract_strided_slice %21 {offsets = [8, 0], sizes = [8, 32], strides = [1, 1]} : vector<64x32xf32> to vector<8x32xf32>
    %95 = arith.addf %79, %30 : vector<8x32xf32>
    %96 = arith.mulf %86, %95 : vector<8x32xf32>
    %97 = arith.addf %94, %96 : vector<8x32xf32>
    %98 = math.tanh %97 : vector<8x32xf32>
    %99 = arith.subf %76, %98 : vector<8x32xf32>
    %100 = arith.mulf %93, %99 : vector<8x32xf32>
    %101 = arith.addf %98, %100 : vector<8x32xf32>
    %102 = arith.select %37, %101, %76 : vector<8x32xi1>, vector<8x32xf32>
    %cst_43 = arith.constant dense<0.000000e+00> : vector<8x32xf32>
    %103 = tpu.matmul %102, %23, %cst_43 {dimension_numbers = #tpu.dot_dimension_numbers<[1], [0], [0], [1], [0, 0, 1, 1], [], []>} : vector<8x32xf32>, vector<32x32xf32>, vector<8x32xf32> -> vector<8x32xf32>
    %cst_44 = arith.constant dense<0.000000e+00> : vector<8x32xf32>
    %104 = tpu.matmul %102, %25, %cst_44 {dimension_numbers = #tpu.dot_dimension_numbers<[1], [0], [0], [1], [0, 0, 1, 1], [], []>} : vector<8x32xf32>, vector<32x32xf32>, vector<8x32xf32> -> vector<8x32xf32>
    %cst_45 = arith.constant dense<0.000000e+00> : vector<8x32xf32>
    %105 = tpu.matmul %102, %27, %cst_45 {dimension_numbers = #tpu.dot_dimension_numbers<[1], [0], [0], [1], [0, 0, 1, 1], [], []>} : vector<8x32xf32>, vector<32x32xf32>, vector<8x32xf32> -> vector<8x32xf32>
    %106 = vector.extract_strided_slice %7 {offsets = [16, 0], sizes = [8, 32], strides = [1, 1]} : vector<64x32xf32> to vector<8x32xf32>
    %107 = arith.addf %106, %103 : vector<8x32xf32>
    %108 = arith.negf %107 : vector<8x32xf32>
    %109 = math.exp %108 : vector<8x32xf32>
    %cst_46 = arith.constant 1.000000e+00 : f32
    %110 = vector.broadcast %cst_46 : f32 to vector<8x32xf32>
    %111 = arith.addf %110, %109 : vector<8x32xf32>
    %112 = arith.divf %110, %111 : vector<8x32xf32>
    %113 = vector.extract_strided_slice %14 {offsets = [16, 0], sizes = [8, 32], strides = [1, 1]} : vector<64x32xf32> to vector<8x32xf32>
    %114 = arith.addf %113, %104 : vector<8x32xf32>
    %115 = arith.negf %114 : vector<8x32xf32>
    %116 = math.exp %115 : vector<8x32xf32>
    %cst_47 = arith.constant 1.000000e+00 : f32
    %117 = vector.broadcast %cst_47 : f32 to vector<8x32xf32>
    %118 = arith.addf %117, %116 : vector<8x32xf32>
    %119 = arith.divf %117, %118 : vector<8x32xf32>
    %120 = vector.extract_strided_slice %21 {offsets = [16, 0], sizes = [8, 32], strides = [1, 1]} : vector<64x32xf32> to vector<8x32xf32>
    %121 = arith.addf %105, %30 : vector<8x32xf32>
    %122 = arith.mulf %112, %121 : vector<8x32xf32>
    %123 = arith.addf %120, %122 : vector<8x32xf32>
    %124 = math.tanh %123 : vector<8x32xf32>
    %125 = arith.subf %102, %124 : vector<8x32xf32>
    %126 = arith.mulf %119, %125 : vector<8x32xf32>
    %127 = arith.addf %124, %126 : vector<8x32xf32>
    %128 = arith.select %39, %127, %102 : vector<8x32xi1>, vector<8x32xf32>
    %cst_48 = arith.constant dense<0.000000e+00> : vector<8x32xf32>
    %129 = tpu.matmul %128, %23, %cst_48 {dimension_numbers = #tpu.dot_dimension_numbers<[1], [0], [0], [1], [0, 0, 1, 1], [], []>} : vector<8x32xf32>, vector<32x32xf32>, vector<8x32xf32> -> vector<8x32xf32>
    %cst_49 = arith.constant dense<0.000000e+00> : vector<8x32xf32>
    %130 = tpu.matmul %128, %25, %cst_49 {dimension_numbers = #tpu.dot_dimension_numbers<[1], [0], [0], [1], [0, 0, 1, 1], [], []>} : vector<8x32xf32>, vector<32x32xf32>, vector<8x32xf32> -> vector<8x32xf32>
    %cst_50 = arith.constant dense<0.000000e+00> : vector<8x32xf32>
    %131 = tpu.matmul %128, %27, %cst_50 {dimension_numbers = #tpu.dot_dimension_numbers<[1], [0], [0], [1], [0, 0, 1, 1], [], []>} : vector<8x32xf32>, vector<32x32xf32>, vector<8x32xf32> -> vector<8x32xf32>
    %132 = vector.extract_strided_slice %7 {offsets = [24, 0], sizes = [8, 32], strides = [1, 1]} : vector<64x32xf32> to vector<8x32xf32>
    %133 = arith.addf %132, %129 : vector<8x32xf32>
    %134 = arith.negf %133 : vector<8x32xf32>
    %135 = math.exp %134 : vector<8x32xf32>
    %cst_51 = arith.constant 1.000000e+00 : f32
    %136 = vector.broadcast %cst_51 : f32 to vector<8x32xf32>
    %137 = arith.addf %136, %135 : vector<8x32xf32>
    %138 = arith.divf %136, %137 : vector<8x32xf32>
    %139 = vector.extract_strided_slice %14 {offsets = [24, 0], sizes = [8, 32], strides = [1, 1]} : vector<64x32xf32> to vector<8x32xf32>
    %140 = arith.addf %139, %130 : vector<8x32xf32>
    %141 = arith.negf %140 : vector<8x32xf32>
    %142 = math.exp %141 : vector<8x32xf32>
    %cst_52 = arith.constant 1.000000e+00 : f32
    %143 = vector.broadcast %cst_52 : f32 to vector<8x32xf32>
    %144 = arith.addf %143, %142 : vector<8x32xf32>
    %145 = arith.divf %143, %144 : vector<8x32xf32>
    %146 = vector.extract_strided_slice %21 {offsets = [24, 0], sizes = [8, 32], strides = [1, 1]} : vector<64x32xf32> to vector<8x32xf32>
    %147 = arith.addf %131, %30 : vector<8x32xf32>
    %148 = arith.mulf %138, %147 : vector<8x32xf32>
    %149 = arith.addf %146, %148 : vector<8x32xf32>
    %150 = math.tanh %149 : vector<8x32xf32>
    %151 = arith.subf %128, %150 : vector<8x32xf32>
    %152 = arith.mulf %145, %151 : vector<8x32xf32>
    %153 = arith.addf %150, %152 : vector<8x32xf32>
    %154 = arith.select %41, %153, %128 : vector<8x32xi1>, vector<8x32xf32>
    %cst_53 = arith.constant dense<0.000000e+00> : vector<8x32xf32>
    %155 = tpu.matmul %154, %23, %cst_53 {dimension_numbers = #tpu.dot_dimension_numbers<[1], [0], [0], [1], [0, 0, 1, 1], [], []>} : vector<8x32xf32>, vector<32x32xf32>, vector<8x32xf32> -> vector<8x32xf32>
    %cst_54 = arith.constant dense<0.000000e+00> : vector<8x32xf32>
    %156 = tpu.matmul %154, %25, %cst_54 {dimension_numbers = #tpu.dot_dimension_numbers<[1], [0], [0], [1], [0, 0, 1, 1], [], []>} : vector<8x32xf32>, vector<32x32xf32>, vector<8x32xf32> -> vector<8x32xf32>
    %cst_55 = arith.constant dense<0.000000e+00> : vector<8x32xf32>
    %157 = tpu.matmul %154, %27, %cst_55 {dimension_numbers = #tpu.dot_dimension_numbers<[1], [0], [0], [1], [0, 0, 1, 1], [], []>} : vector<8x32xf32>, vector<32x32xf32>, vector<8x32xf32> -> vector<8x32xf32>
    %158 = vector.extract_strided_slice %7 {offsets = [32, 0], sizes = [8, 32], strides = [1, 1]} : vector<64x32xf32> to vector<8x32xf32>
    %159 = arith.addf %158, %155 : vector<8x32xf32>
    %160 = arith.negf %159 : vector<8x32xf32>
    %161 = math.exp %160 : vector<8x32xf32>
    %cst_56 = arith.constant 1.000000e+00 : f32
    %162 = vector.broadcast %cst_56 : f32 to vector<8x32xf32>
    %163 = arith.addf %162, %161 : vector<8x32xf32>
    %164 = arith.divf %162, %163 : vector<8x32xf32>
    %165 = vector.extract_strided_slice %14 {offsets = [32, 0], sizes = [8, 32], strides = [1, 1]} : vector<64x32xf32> to vector<8x32xf32>
    %166 = arith.addf %165, %156 : vector<8x32xf32>
    %167 = arith.negf %166 : vector<8x32xf32>
    %168 = math.exp %167 : vector<8x32xf32>
    %cst_57 = arith.constant 1.000000e+00 : f32
    %169 = vector.broadcast %cst_57 : f32 to vector<8x32xf32>
    %170 = arith.addf %169, %168 : vector<8x32xf32>
    %171 = arith.divf %169, %170 : vector<8x32xf32>
    %172 = vector.extract_strided_slice %21 {offsets = [32, 0], sizes = [8, 32], strides = [1, 1]} : vector<64x32xf32> to vector<8x32xf32>
    %173 = arith.addf %157, %30 : vector<8x32xf32>
    %174 = arith.mulf %164, %173 : vector<8x32xf32>
    %175 = arith.addf %172, %174 : vector<8x32xf32>
    %176 = math.tanh %175 : vector<8x32xf32>
    %177 = arith.subf %154, %176 : vector<8x32xf32>
    %178 = arith.mulf %171, %177 : vector<8x32xf32>
    %179 = arith.addf %176, %178 : vector<8x32xf32>
    %180 = arith.select %43, %179, %154 : vector<8x32xi1>, vector<8x32xf32>
    %cst_58 = arith.constant dense<0.000000e+00> : vector<8x32xf32>
    %181 = tpu.matmul %180, %23, %cst_58 {dimension_numbers = #tpu.dot_dimension_numbers<[1], [0], [0], [1], [0, 0, 1, 1], [], []>} : vector<8x32xf32>, vector<32x32xf32>, vector<8x32xf32> -> vector<8x32xf32>
    %cst_59 = arith.constant dense<0.000000e+00> : vector<8x32xf32>
    %182 = tpu.matmul %180, %25, %cst_59 {dimension_numbers = #tpu.dot_dimension_numbers<[1], [0], [0], [1], [0, 0, 1, 1], [], []>} : vector<8x32xf32>, vector<32x32xf32>, vector<8x32xf32> -> vector<8x32xf32>
    %cst_60 = arith.constant dense<0.000000e+00> : vector<8x32xf32>
    %183 = tpu.matmul %180, %27, %cst_60 {dimension_numbers = #tpu.dot_dimension_numbers<[1], [0], [0], [1], [0, 0, 1, 1], [], []>} : vector<8x32xf32>, vector<32x32xf32>, vector<8x32xf32> -> vector<8x32xf32>
    %184 = vector.extract_strided_slice %7 {offsets = [40, 0], sizes = [8, 32], strides = [1, 1]} : vector<64x32xf32> to vector<8x32xf32>
    %185 = arith.addf %184, %181 : vector<8x32xf32>
    %186 = arith.negf %185 : vector<8x32xf32>
    %187 = math.exp %186 : vector<8x32xf32>
    %cst_61 = arith.constant 1.000000e+00 : f32
    %188 = vector.broadcast %cst_61 : f32 to vector<8x32xf32>
    %189 = arith.addf %188, %187 : vector<8x32xf32>
    %190 = arith.divf %188, %189 : vector<8x32xf32>
    %191 = vector.extract_strided_slice %14 {offsets = [40, 0], sizes = [8, 32], strides = [1, 1]} : vector<64x32xf32> to vector<8x32xf32>
    %192 = arith.addf %191, %182 : vector<8x32xf32>
    %193 = arith.negf %192 : vector<8x32xf32>
    %194 = math.exp %193 : vector<8x32xf32>
    %cst_62 = arith.constant 1.000000e+00 : f32
    %195 = vector.broadcast %cst_62 : f32 to vector<8x32xf32>
    %196 = arith.addf %195, %194 : vector<8x32xf32>
    %197 = arith.divf %195, %196 : vector<8x32xf32>
    %198 = vector.extract_strided_slice %21 {offsets = [40, 0], sizes = [8, 32], strides = [1, 1]} : vector<64x32xf32> to vector<8x32xf32>
    %199 = arith.addf %183, %30 : vector<8x32xf32>
    %200 = arith.mulf %190, %199 : vector<8x32xf32>
    %201 = arith.addf %198, %200 : vector<8x32xf32>
    %202 = math.tanh %201 : vector<8x32xf32>
    %203 = arith.subf %180, %202 : vector<8x32xf32>
    %204 = arith.mulf %197, %203 : vector<8x32xf32>
    %205 = arith.addf %202, %204 : vector<8x32xf32>
    %206 = arith.select %45, %205, %180 : vector<8x32xi1>, vector<8x32xf32>
    %cst_63 = arith.constant dense<0.000000e+00> : vector<8x32xf32>
    %207 = tpu.matmul %206, %23, %cst_63 {dimension_numbers = #tpu.dot_dimension_numbers<[1], [0], [0], [1], [0, 0, 1, 1], [], []>} : vector<8x32xf32>, vector<32x32xf32>, vector<8x32xf32> -> vector<8x32xf32>
    %cst_64 = arith.constant dense<0.000000e+00> : vector<8x32xf32>
    %208 = tpu.matmul %206, %25, %cst_64 {dimension_numbers = #tpu.dot_dimension_numbers<[1], [0], [0], [1], [0, 0, 1, 1], [], []>} : vector<8x32xf32>, vector<32x32xf32>, vector<8x32xf32> -> vector<8x32xf32>
    %cst_65 = arith.constant dense<0.000000e+00> : vector<8x32xf32>
    %209 = tpu.matmul %206, %27, %cst_65 {dimension_numbers = #tpu.dot_dimension_numbers<[1], [0], [0], [1], [0, 0, 1, 1], [], []>} : vector<8x32xf32>, vector<32x32xf32>, vector<8x32xf32> -> vector<8x32xf32>
    %210 = vector.extract_strided_slice %7 {offsets = [48, 0], sizes = [8, 32], strides = [1, 1]} : vector<64x32xf32> to vector<8x32xf32>
    %211 = arith.addf %210, %207 : vector<8x32xf32>
    %212 = arith.negf %211 : vector<8x32xf32>
    %213 = math.exp %212 : vector<8x32xf32>
    %cst_66 = arith.constant 1.000000e+00 : f32
    %214 = vector.broadcast %cst_66 : f32 to vector<8x32xf32>
    %215 = arith.addf %214, %213 : vector<8x32xf32>
    %216 = arith.divf %214, %215 : vector<8x32xf32>
    %217 = vector.extract_strided_slice %14 {offsets = [48, 0], sizes = [8, 32], strides = [1, 1]} : vector<64x32xf32> to vector<8x32xf32>
    %218 = arith.addf %217, %208 : vector<8x32xf32>
    %219 = arith.negf %218 : vector<8x32xf32>
    %220 = math.exp %219 : vector<8x32xf32>
    %cst_67 = arith.constant 1.000000e+00 : f32
    %221 = vector.broadcast %cst_67 : f32 to vector<8x32xf32>
    %222 = arith.addf %221, %220 : vector<8x32xf32>
    %223 = arith.divf %221, %222 : vector<8x32xf32>
    %224 = vector.extract_strided_slice %21 {offsets = [48, 0], sizes = [8, 32], strides = [1, 1]} : vector<64x32xf32> to vector<8x32xf32>
    %225 = arith.addf %209, %30 : vector<8x32xf32>
    %226 = arith.mulf %216, %225 : vector<8x32xf32>
    %227 = arith.addf %224, %226 : vector<8x32xf32>
    %228 = math.tanh %227 : vector<8x32xf32>
    %229 = arith.subf %206, %228 : vector<8x32xf32>
    %230 = arith.mulf %223, %229 : vector<8x32xf32>
    %231 = arith.addf %228, %230 : vector<8x32xf32>
    %232 = arith.select %47, %231, %206 : vector<8x32xi1>, vector<8x32xf32>
    %cst_68 = arith.constant dense<0.000000e+00> : vector<8x32xf32>
    %233 = tpu.matmul %232, %23, %cst_68 {dimension_numbers = #tpu.dot_dimension_numbers<[1], [0], [0], [1], [0, 0, 1, 1], [], []>} : vector<8x32xf32>, vector<32x32xf32>, vector<8x32xf32> -> vector<8x32xf32>
    %cst_69 = arith.constant dense<0.000000e+00> : vector<8x32xf32>
    %234 = tpu.matmul %232, %25, %cst_69 {dimension_numbers = #tpu.dot_dimension_numbers<[1], [0], [0], [1], [0, 0, 1, 1], [], []>} : vector<8x32xf32>, vector<32x32xf32>, vector<8x32xf32> -> vector<8x32xf32>
    %cst_70 = arith.constant dense<0.000000e+00> : vector<8x32xf32>
    %235 = tpu.matmul %232, %27, %cst_70 {dimension_numbers = #tpu.dot_dimension_numbers<[1], [0], [0], [1], [0, 0, 1, 1], [], []>} : vector<8x32xf32>, vector<32x32xf32>, vector<8x32xf32> -> vector<8x32xf32>
    %236 = vector.extract_strided_slice %7 {offsets = [56, 0], sizes = [8, 32], strides = [1, 1]} : vector<64x32xf32> to vector<8x32xf32>
    %237 = arith.addf %236, %233 : vector<8x32xf32>
    %238 = arith.negf %237 : vector<8x32xf32>
    %239 = math.exp %238 : vector<8x32xf32>
    %cst_71 = arith.constant 1.000000e+00 : f32
    %240 = vector.broadcast %cst_71 : f32 to vector<8x32xf32>
    %241 = arith.addf %240, %239 : vector<8x32xf32>
    %242 = arith.divf %240, %241 : vector<8x32xf32>
    %243 = vector.extract_strided_slice %14 {offsets = [56, 0], sizes = [8, 32], strides = [1, 1]} : vector<64x32xf32> to vector<8x32xf32>
    %244 = arith.addf %243, %234 : vector<8x32xf32>
    %245 = arith.negf %244 : vector<8x32xf32>
    %246 = math.exp %245 : vector<8x32xf32>
    %cst_72 = arith.constant 1.000000e+00 : f32
    %247 = vector.broadcast %cst_72 : f32 to vector<8x32xf32>
    %248 = arith.addf %247, %246 : vector<8x32xf32>
    %249 = arith.divf %247, %248 : vector<8x32xf32>
    %250 = vector.extract_strided_slice %21 {offsets = [56, 0], sizes = [8, 32], strides = [1, 1]} : vector<64x32xf32> to vector<8x32xf32>
    %251 = arith.addf %235, %30 : vector<8x32xf32>
    %252 = arith.mulf %242, %251 : vector<8x32xf32>
    %253 = arith.addf %250, %252 : vector<8x32xf32>
    %254 = math.tanh %253 : vector<8x32xf32>
    %255 = arith.subf %232, %254 : vector<8x32xf32>
    %256 = arith.mulf %249, %255 : vector<8x32xf32>
    %257 = arith.addf %254, %256 : vector<8x32xf32>
    %258 = arith.select %49, %257, %232 : vector<8x32xi1>, vector<8x32xf32>
    %c0_73 = arith.constant 0 : index
    %c0_74 = arith.constant 0 : index
    %259 = vector.load %arg6[%c0_73, %c0_74] : memref<8x32xf32, #tpu.memory_space<vmem>>, vector<8x32xf32>
    tpu.vector_store %arg6[%c0_73, %c0_74], %258 {strides = array<i32>} : memref<8x32xf32, #tpu.memory_space<vmem>>, vector<8x32xf32>,
    return
  }
}

</mosaic_0001>

<llo_original>
// kernel: gru_layer0_final.1
$region0: #{gru_layer0_final.1}
  #allocation0 [shape = 'u32[]', space=smem, size = 0x4, offset = 0x4, fixed_abs, tag = 'smem constant byte address 0x4 - core index']
  #allocation1 [shape = 'u32[72,128]{1,0:T(1,128)}', space=vmem, size = 0x9000, scoped, tag = 'internal scratch']
  %s0 = inlined_call_operand.vmem [shape: f32[64,32], index: 0, kind: input, shape index: {}]
  %s1 = inlined_call_operand.vmem [shape: s32[8,1], index: 1, kind: input, shape index: {}]
  %s2 = inlined_call_operand.vmem [shape: f32[3,32,32], index: 2, kind: input, shape index: {}]
  %s3 = inlined_call_operand.hbm [shape: f32[3,32,32], index: 3, kind: input, shape index: {}]
  %s4 = inlined_call_operand.vmem [shape: f32[3,1,32], index: 4, kind: input, shape index: {}]
  %s5 = inlined_call_operand.vmem [shape: f32[1,32], index: 5, kind: input, shape index: {}]
  %s6 = inlined_call_operand.vmem [shape: f32[8,32], index: 6, kind: output, shape index: {}]
  %s7 = sld [smem:[#allocation0]]
  $region38: #{gru_layer0_final.1} parent=0
    _
  %s9 = ssub.s32 1, %s7
  %s10 = scalar_select 0, %s9, %s7
  $region1: #{gru_layer0_final.1} parent=0
    #allocation2 [shape = 'u8[49152]{0}', space=vmem, size = 0xc000, scoped, tag = 'input window, operand 3, single buffered']
    #allocation3 [shape = 's32[1]{0}', space=sflag, size = 0x4, scoped, tag = 'scoped memory for gru_layer0_final.1']
    %11 = vsyncpa [#allocation3], 0
    // Predicated region
    $region2: #{gru_layer0_final.1} parent=1 // pred_check
      _
    $region3: #{gru_layer0_final.1} parent=1 // pred_check_branch
      %13 = sbr.rel (0) target = $region5
    $region4: #{gru_layer0_final.1} parent=1 // pred_region
      _
    $region5: #{gru_layer0_final.1} parent=1 // pred_fallthru
      _
    // Predicated region
    $region6: #{gru_layer0_final.1} parent=1 // pred_check
      _
    $region7: #{gru_layer0_final.1} parent=1 // pred_check_branch
      %15 = sbr.rel (0) target = $region9
    $region8: #{gru_layer0_final.1} parent=1 // pred_region
      _
    $region9: #{gru_layer0_final.1} parent=1 // pred_fallthru
      _
    // Predicated region
    $region10: #{gru_layer0_final.1} parent=1 // pred_check
      _
    $region11: #{gru_layer0_final.1} parent=1 // pred_check_branch
      %17 = sbr.rel (0) target = $region13
    $region12: #{gru_layer0_final.1} parent=1 // pred_region
      _
    $region13: #{gru_layer0_final.1} parent=1 // pred_fallthru
      _
    // Predicated region
    $region14: #{gru_layer0_final.1} parent=1 // pred_check
      _
    $region15: #{gru_layer0_final.1} parent=1 // pred_check_branch
      %19 = sbr.rel (0) target = $region17
    $region16: #{gru_layer0_final.1} parent=1 // pred_region
      %21 = vsyncadd [#allocation3], 0
      %s22 = sshll.u32 %s3, 4
      %s23 = int_to_ptr.hbm [resolvable:$true] %s22
      %s24 = sshll.u32 [#allocation2], 4
      %s25 = int_to_ptr.vmem [resolvable:$true] %s24
      %30 = dma.hbm_to_vmem [thread:$0]  %s23, 1536, %s25, [#allocation3], 128, 128, 8
    $region17: #{gru_layer0_final.1} parent=1 // pred_fallthru
      _
    // Predicated region
    $region18: #{gru_layer0_final.1} parent=1 // pred_check
      _
    $region19: #{gru_layer0_final.1} parent=1 // pred_check_branch
      %32 = sbr.rel (0) target = $region21
    $region20: #{gru_layer0_final.1} parent=1 // pred_region
      _
    $region21: #{gru_layer0_final.1} parent=1 // pred_fallthru
      _
    // Predicated region
    $region22: #{gru_layer0_final.1} parent=1 // pred_check
      _
    $region23: #{gru_layer0_final.1} parent=1 // pred_check_branch
      %34 = sbr.rel (0) target = $region25
    $region24: #{gru_layer0_final.1} parent=1 // pred_region
      _
    $region25: #{gru_layer0_final.1} parent=1 // pred_fallthru
      _
    // Predicated region
    $region26: #{gru_layer0_final.1} parent=1 // pred_check
      _
    $region27: #{gru_layer0_final.1} parent=1 // pred_check_branch
      %36 = sbr.rel (0) target = $region29
    $region28: #{gru_layer0_final.1} parent=1 // pred_region
      %38 = dma.done [#allocation3], 1536
    $region29: #{gru_layer0_final.1} parent=1 // pred_fallthru
      _
    %v39 = vld [vmem:[%s0] sm:$0xff]
    %v40 = vld [vmem:[%s0 + $0x8] sm:$0xff]
    %v41 = vld [vmem:[%s0 + $0x10] sm:$0xff]
    %v42 = vld [vmem:[%s0 + $0x18] sm:$0xff]
    %v43 = vld [vmem:[%s0 + $0x20] sm:$0xff]
    %v44 = vld [vmem:[%s0 + $0x28] sm:$0xff]
    %v45 = vld [vmem:[%s0 + $0x30] sm:$0xff]
    %v46 = vld [vmem:[%s0 + $0x38] sm:$0xff]
    %v47 = vld [vmem:[%s2] sm:$0xff]
    %v48 = vld [vmem:[%s2 + $0x8] sm:$0xff]
    %v49 = vld [vmem:[%s2 + $0x10] sm:$0xff]
    %v50 = vld [vmem:[%s2 + $0x18] sm:$0xff]
    %v51 = vld [vmem:[%s4] sm:$0x1]
    %v53 = vperm.slane %v51, 0
    %vm55 = vcmask 261120
    %v57 = vsel %vm55, %v39, 0
    %v60 = vsel %vm55, %v40, 0
    %v63 = vsel %vm55, %v41, 0
    %v66 = vsel %vm55, %v42, 0
    %v69 = vsel %vm55, %v43, 0
    %v72 = vsel %vm55, %v44, 0
    %v75 = vsel %vm55, %v45, 0
    %v78 = vsel %vm55, %v46, 0
    %80 = vmatpush.msra.mxu0 0.0
    %81 = vmatpush.msra.mxu0 0.0
    %82 = vmatpush.msra.mxu0 0.0
    %83 = vmatpush.msra.mxu0 0.0
    %84 = vmatpush.msra.mxu0 0.0
    %85 = vmatpush.msra.mxu0 0.0
    %86 = vmatpush.msra.mxu0 0.0
    %87 = vmatpush.msra.mxu0 0.0
    %88 = vmatpush.msra.mxu0 0.0
    %89 = vmatpush.msra.mxu0 0.0
    %90 = vmatpush.msra.mxu0 0.0
    %91 = vmatpush.msra.mxu0 0.0
    %92 = vmatpush.msra.mxu0 %v50
    %93 = vmatpush.msra.mxu0 %v49
    %94 = vmatpush.msra.mxu0 %v48
    %95 = vmatpush.msra.mxu0 %v47
    %96 = vmatmul.f32.gmra.mxu0 %v57
    %v97 = vpop.f32.mrf.mxu0
    %v98 = vadd.f32 %v53, %v97
    %99 = vmatmul.f32.gmra.mxu0 %v60
    %v100 = vpop.f32.mrf.mxu0
    %v101 = vadd.f32 %v53, %v100
    %102 = vmatmul.f32.gmra.mxu0 %v63
    %v103 = vpop.f32.mrf.mxu0
    %v104 = vadd.f32 %v53, %v103
    %105 = vmatmul.f32.gmra.mxu0 %v66
    %v106 = vpop.f32.mrf.mxu0
    %v107 = vadd.f32 %v53, %v106
    %108 = vmatmul.f32.gmra.mxu0 %v69
    %v109 = vpop.f32.mrf.mxu0
    %v110 = vadd.f32 %v53, %v109
    %111 = vmatmul.f32.gmra.mxu0 %v72
    %v112 = vpop.f32.mrf.mxu0
    %v113 = vadd.f32 %v53, %v112
    %114 = vmatmul.f32.gmra.mxu0 %v75
    %v115 = vpop.f32.mrf.mxu0
    %v116 = vadd.f32 %v53, %v115
    %117 = vmatmul.f32.gmra.mxu0 %v78
    %v118 = vpop.f32.mrf.mxu0
    %v119 = vadd.f32 %v53, %v118
    %120 = vdwg.mxu0
    %s121 = scalar_lea.vmem %s2, 32
    %v122 = vld [vmem:[%s121] sm:$0xff]
    %v123 = vld [vmem:[%s121 + $0x8] sm:$0xff]
    %v124 = vld [vmem:[%s121 + $0x10] sm:$0xff]
    %v125 = vld [vmem:[%s121 + $0x18] sm:$0xff]
    %s126 = scalar_lea.vmem %s4, 1
    %v127 = vld [vmem:[%s126] sm:$0x1]
    %v129 = vperm.slane %v127, 0
    %131 = vmatpush.msra.mxu0 0.0
    %132 = vmatpush.msra.mxu0 0.0
    %133 = vmatpush.msra.mxu0 0.0
    %134 = vmatpush.msra.mxu0 0.0
    %135 = vmatpush.msra.mxu0 0.0
    %136 = vmatpush.msra.mxu0 0.0
    %137 = vmatpush.msra.mxu0 0.0
    %138 = vmatpush.msra.mxu0 0.0
    %139 = vmatpush.msra.mxu0 0.0
    %140 = vmatpush.msra.mxu0 0.0
    %141 = vmatpush.msra.mxu0 0.0
    %142 = vmatpush.msra.mxu0 0.0
    %143 = vmatpush.msra.mxu0 %v125
    %144 = vmatpush.msra.mxu0 %v124
    %145 = vmatpush.msra.mxu0 %v123
    %146 = vmatpush.msra.mxu0 %v122
    %147 = vmatmul.f32.gmra.mxu0 %v57
    %v148 = vpop.f32.mrf.mxu0
    %v149 = vadd.f32 %v129, %v148
    %150 = vmatmul.f32.gmra.mxu0 %v60
    %v151 = vpop.f32.mrf.mxu0
    %v152 = vadd.f32 %v129, %v151
    %153 = vmatmul.f32.gmra.mxu0 %v63
    %v154 = vpop.f32.mrf.mxu0
    %v155 = vadd.f32 %v129, %v154
    %156 = vmatmul.f32.gmra.mxu0 %v66
    %v157 = vpop.f32.mrf.mxu0
    %v158 = vadd.f32 %v129, %v157
    %159 = vmatmul.f32.gmra.mxu0 %v69
    %v160 = vpop.f32.mrf.mxu0
    %v161 = vadd.f32 %v129, %v160
    %162 = vmatmul.f32.gmra.mxu0 %v72
    %v163 = vpop.f32.mrf.mxu0
    %v164 = vadd.f32 %v129, %v163
    %165 = vmatmul.f32.gmra.mxu0 %v75
    %v166 = vpop.f32.mrf.mxu0
    %v167 = vadd.f32 %v129, %v166
    %168 = vmatmul.f32.gmra.mxu0 %v78
    %v169 = vpop.f32.mrf.mxu0
    %v170 = vadd.f32 %v129, %v169
    %171 = vdwg.mxu0
    %s172 = scalar_lea.vmem %s2, 64
    %v173 = vld [vmem:[%s172] sm:$0xff]
    %v174 = vld [vmem:[%s172 + $0x8] sm:$0xff]
    %v175 = vld [vmem:[%s172 + $0x10] sm:$0xff]
    %v176 = vld [vmem:[%s172 + $0x18] sm:$0xff]
    %s177 = scalar_lea.vmem %s4, 2
    %v178 = vld [vmem:[%s177] sm:$0x1]
    %v180 = vperm.slane %v178, 0
    %182 = vmatpush.msra.mxu0 0.0
    %183 = vmatpush.msra.mxu0 0.0
    %184 = vmatpush.msra.mxu0 0.0
    %185 = vmatpush.msra.mxu0 0.0
    %186 = vmatpush.msra.mxu0 0.0
    %187 = vmatpush.msra.mxu0 0.0
    %188 = vmatpush.msra.mxu0 0.0
    %189 = vmatpush.msra.mxu0 0.0
    %190 = vmatpush.msra.mxu0 0.0
    %191 = vmatpush.msra.mxu0 0.0
    %192 = vmatpush.msra.mxu0 0.0
    %193 = vmatpush.msra.mxu0 0.0
    %194 = vmatpush.msra.mxu0 %v176
    %195 = vmatpush.msra.mxu0 %v175
    %196 = vmatpush.msra.mxu0 %v174
    %197 = vmatpush.msra.mxu0 %v173
    %198 = vmatmul.f32.gmra.mxu0 %v57
    %v199 = vpop.f32.mrf.mxu0
    %v200 = vadd.f32 %v180, %v199
    %201 = vmatmul.f32.gmra.mxu0 %v60
    %v202 = vpop.f32.mrf.mxu0
    %v203 = vadd.f32 %v180, %v202
    %204 = vmatmul.f32.gmra.mxu0 %v63
    %v205 = vpop.f32.mrf.mxu0
    %v206 = vadd.f32 %v180, %v205
    %207 = vmatmul.f32.gmra.mxu0 %v66
    %v208 = vpop.f32.mrf.mxu0
    %v209 = vadd.f32 %v180, %v208
    %210 = vmatmul.f32.gmra.mxu0 %v69
    %v211 = vpop.f32.mrf.mxu0
    %v212 = vadd.f32 %v180, %v211
    %213 = vmatmul.f32.gmra.mxu0 %v72
    %v214 = vpop.f32.mrf.mxu0
    %v215 = vadd.f32 %v180, %v214
    %216 = vmatmul.f32.gmra.mxu0 %v75
    %v217 = vpop.f32.mrf.mxu0
    %v218 = vadd.f32 %v180, %v217
    %219 = vmatmul.f32.gmra.mxu0 %v78
    %v220 = vpop.f32.mrf.mxu0
    %v221 = vadd.f32 %v180, %v220
    %222 = vdwg.mxu0
    %v223 = vld [vmem:[#allocation2] sm:$0xff]
    %v224 = vld [vmem:[#allocation2 + $0x8] sm:$0xff]
    %v225 = vld [vmem:[#allocation2 + $0x10] sm:$0xff]
    %v226 = vld [vmem:[#allocation2 + $0x18] sm:$0xff]
    %s227 = scalar_lea.vmem [#allocation2], 32
    %v228 = vld [vmem:[%s227] sm:$0xff]
    %v229 = vld [vmem:[%s227 + $0x8] sm:$0xff]
    %v230 = vld [vmem:[%s227 + $0x10] sm:$0xff]
    %v231 = vld [vmem:[%s227 + $0x18] sm:$0xff]
    %s232 = scalar_lea.vmem [#allocation2], 64
    %v233 = vld [vmem:[%s232] sm:$0xff]
    %v234 = vld [vmem:[%s232 + $0x8] sm:$0xff]
    %v235 = vld [vmem:[%s232 + $0x10] sm:$0xff]
    %v236 = vld [vmem:[%s232 + $0x18] sm:$0xff]
    %v237 = vld [vmem:[%s5] sm:$0x1]
    %v239 = vperm.slane %v237, 0
    %v241 = vld [vmem:[%s1] sm:$0xff]
    %242 = vset.pattern.permute.xlu0 0
    %243 = vperm.xlu0 %242, %v241
    %v244 = vpop.permute.xlu0 %243
    %vm245 = vcmp.gt.s32.totalorder %v244, 0
    %vm246 = vcmp.gt.s32.totalorder %v244, 1
    %vm247 = vcmp.gt.s32.totalorder %v244, 2
    %vm248 = vcmp.gt.s32.totalorder %v244, 3
    %vm249 = vcmp.gt.s32.totalorder %v244, 4
    %vm250 = vcmp.gt.s32.totalorder %v244, 5
    %vm251 = vcmp.gt.s32.totalorder %v244, 6
    %vm252 = vcmp.gt.s32.totalorder %v244, 7
    %v254 = vsel %vm55, 0.0, 0
    %256 = vmatpush.msra.mxu0 0.0
    %257 = vmatpush.msra.mxu0 0.0
    %258 = vmatpush.msra.mxu0 0.0
    %259 = vmatpush.msra.mxu0 0.0
    %260 = vmatpush.msra.mxu0 0.0
    %261 = vmatpush.msra.mxu0 0.0
    %262 = vmatpush.msra.mxu0 0.0
    %263 = vmatpush.msra.mxu0 0.0
    %264 = vmatpush.msra.mxu0 0.0
    %265 = vmatpush.msra.mxu0 0.0
    %266 = vmatpush.msra.mxu0 0.0
    %267 = vmatpush.msra.mxu0 0.0
    %268 = vmatpush.msra.mxu0 %v226
    %269 = vmatpush.msra.mxu0 %v225
    %270 = vmatpush.msra.mxu0 %v224
    %271 = vmatpush.msra.mxu0 %v223
    %272 = vmatmul.f32.gmra.mxu0 %v254
    %v273 = vpop.f32.mrf.mxu0
    %v274 = vadd.f32 0.0, %v273
    %275 = vdwg.mxu0
    %276 = vmatpush.msra.mxu0 0.0
    %277 = vmatpush.msra.mxu0 0.0
    %278 = vmatpush.msra.mxu0 0.0
    %279 = vmatpush.msra.mxu0 0.0
    %280 = vmatpush.msra.mxu0 0.0
    %281 = vmatpush.msra.mxu0 0.0
    %282 = vmatpush.msra.mxu0 0.0
    %283 = vmatpush.msra.mxu0 0.0
    %284 = vmatpush.msra.mxu0 0.0
    %285 = vmatpush.msra.mxu0 0.0
    %286 = vmatpush.msra.mxu0 0.0
    %287 = vmatpush.msra.mxu0 0.0
    %288 = vmatpush.msra.mxu0 %v231
    %289 = vmatpush.msra.mxu0 %v230
    %290 = vmatpush.msra.mxu0 %v229
    %291 = vmatpush.msra.mxu0 %v228
    %292 = vmatmul.f32.gmra.mxu0 %v254
    %v293 = vpop.f32.mrf.mxu0
    %v294 = vadd.f32 0.0, %v293
    %295 = vdwg.mxu0
    %v296 = vadd.f32 %v98, %v274
    %v297 = vxor.u32 %v296, 2147483648
    %v298 = vmul.f32 %v297, 1.442695
    %v299 = vpow.pop %v298
    %v300 = vadd.f32 %v299, 1.0
    %v301 = vrcp.pop %v300
    %v302 = vmul.f32 %v300, %v301
    %v303 = vsub.f32 1.0, %v302
    %v304 = vmul.f32 %v301, %v303
    %v305 = vadd.f32 %v301, %v304
    %vm306 = vweird.f32 %v300
    %vm307 = vweird.f32 %v301
    %vm308 = vmor %vm306, %vm307
    %v309 = vsel %vm308, %v301, %v305
    %v310 = vand.u32 2147483647, %v300
    %vm311 = vcmp.eq.f32.partialorder %v310, 8.507059e+37
    %v312 = vand.u32 %v300, 2147483648
    %v313 = vor.u32 1.1754944e-38, %v312
    %v314 = vsel %vm311, %v313, %v309
    %v315 = vmul.f32 1.0, %v314
    %v316 = vadd.f32 %v149, %v294
    %v317 = vxor.u32 %v316, 2147483648
    %v318 = vmul.f32 %v317, 1.442695
    %v319 = vpow.pop %v318
    %v320 = vadd.f32 %v319, 1.0
    %v321 = vrcp.pop %v320
    %v322 = vmul.f32 %v320, %v321
    %v323 = vsub.f32 1.0, %v322
    %v324 = vmul.f32 %v321, %v323
    %v325 = vadd.f32 %v321, %v324
    %vm326 = vweird.f32 %v320
    %vm327 = vweird.f32 %v321
    %vm328 = vmor %vm326, %vm327
    %v329 = vsel %vm328, %v321, %v325
    %v330 = vand.u32 2147483647, %v320
    %vm331 = vcmp.eq.f32.partialorder %v330, 8.507059e+37
    %v332 = vand.u32 %v320, 2147483648
    %v333 = vor.u32 1.1754944e-38, %v332
    %v334 = vsel %vm331, %v333, %v329
    %v335 = vmul.f32 1.0, %v334
    %336 = vmatpush.msra.mxu0 0.0
    %337 = vmatpush.msra.mxu0 0.0
    %338 = vmatpush.msra.mxu0 0.0
    %339 = vmatpush.msra.mxu0 0.0
    %340 = vmatpush.msra.mxu0 0.0
    %341 = vmatpush.msra.mxu0 0.0
    %342 = vmatpush.msra.mxu0 0.0
    %343 = vmatpush.msra.mxu0 0.0
    %344 = vmatpush.msra.mxu0 0.0
    %345 = vmatpush.msra.mxu0 0.0
    %346 = vmatpush.msra.mxu0 0.0
    %347 = vmatpush.msra.mxu0 0.0
    %348 = vmatpush.msra.mxu0 %v236
    %349 = vmatpush.msra.mxu0 %v235
    %350 = vmatpush.msra.mxu0 %v234
    %351 = vmatpush.msra.mxu0 %v233
    %352 = vmatmul.f32.gmra.mxu0 %v254
    %v353 = vpop.f32.mrf.mxu0
    %v354 = vadd.f32 %v239, %v353
    %355 = vdwg.mxu0
    %v356 = vmul.f32 %v315, %v354
    %v357 = vadd.f32 %v200, %v356
    %v358 = vtanh.pop %v357
    %v359 = vsub.f32 0.0, %v358
    %v360 = vmul.f32 %v335, %v359
    %v361 = vadd.f32 %v358, %v360
    %v362 = vsel %vm245, %v361, 0.0
    %v364 = vsel %vm55, %v362, 0
    %366 = vmatpush.msra.mxu0 0.0
    %367 = vmatpush.msra.mxu0 0.0
    %368 = vmatpush.msra.mxu0 0.0
    %369 = vmatpush.msra.mxu0 0.0
    %370 = vmatpush.msra.mxu0 0.0
    %371 = vmatpush.msra.mxu0 0.0
    %372 = vmatpush.msra.mxu0 0.0
    %373 = vmatpush.msra.mxu0 0.0
    %374 = vmatpush.msra.mxu0 0.0
    %375 = vmatpush.msra.mxu0 0.0
    %376 = vmatpush.msra.mxu0 0.0
    %377 = vmatpush.msra.mxu0 0.0
    %378 = vmatpush.msra.mxu0 %v226
    %379 = vmatpush.msra.mxu0 %v225
    %380 = vmatpush.msra.mxu0 %v224
    %381 = vmatpush.msra.mxu0 %v223
    %382 = vmatmul.f32.gmra.mxu0 %v364
    %v383 = vpop.f32.mrf.mxu0
    %v384 = vadd.f32 0.0, %v383
    %385 = vdwg.mxu0
    %386 = vmatpush.msra.mxu0 0.0
    %387 = vmatpush.msra.mxu0 0.0
    %388 = vmatpush.msra.mxu0 0.0
    %389 = vmatpush.msra.mxu0 0.0
    %390 = vmatpush.msra.mxu0 0.0
    %391 = vmatpush.msra.mxu0 0.0
    %392 = vmatpush.msra.mxu0 0.0
    %393 = vmatpush.msra.mxu0 0.0
    %394 = vmatpush.msra.mxu0 0.0
    %395 = vmatpush.msra.mxu0 0.0
    %396 = vmatpush.msra.mxu0 0.0
    %397 = vmatpush.msra.mxu0 0.0
    %398 = vmatpush.msra.mxu0 %v231
    %399 = vmatpush.msra.mxu0 %v230
    %400 = vmatpush.msra.mxu0 %v229
    %401 = vmatpush.msra.mxu0 %v228
    %402 = vmatmul.f32.gmra.mxu0 %v364
    %v403 = vpop.f32.mrf.mxu0
    %v404 = vadd.f32 0.0, %v403
    %405 = vdwg.mxu0
    %v406 = vadd.f32 %v101, %v384
    %v407 = vxor.u32 %v406, 2147483648
    %v408 = vmul.f32 %v407, 1.442695
    %v409 = vpow.pop %v408
    %v410 = vadd.f32 %v409, 1.0
    %v411 = vrcp.pop %v410
    %v412 = vmul.f32 %v410, %v411
    %v413 = vsub.f32 1.0, %v412
    %v414 = vmul.f32 %v411, %v413
    %v415 = vadd.f32 %v411, %v414
    %vm416 = vweird.f32 %v410
    %vm417 = vweird.f32 %v411
    %vm418 = vmor %vm416, %vm417
    %v419 = vsel %vm418, %v411, %v415
    %v420 = vand.u32 2147483647, %v410
    %vm421 = vcmp.eq.f32.partialorder %v420, 8.507059e+37
    %v422 = vand.u32 %v410, 2147483648
    %v423 = vor.u32 1.1754944e-38, %v422
    %v424 = vsel %vm421, %v423, %v419
    %v425 = vmul.f32 1.0, %v424
    %v426 = vadd.f32 %v152, %v404
    %v427 = vxor.u32 %v426, 2147483648
    %v428 = vmul.f32 %v427, 1.442695
    %v429 = vpow.pop %v428
    %v430 = vadd.f32 %v429, 1.0
    %v431 = vrcp.pop %v430
    %v432 = vmul.f32 %v430, %v431
    %v433 = vsub.f32 1.0, %v432
    %v434 = vmul.f32 %v431, %v433
    %v435 = vadd.f32 %v431, %v434
    %vm436 = vweird.f32 %v430
    %vm437 = vweird.f32 %v431
    %vm438 = vmor %vm436, %vm437
    %v439 = vsel %vm438, %v431, %v435
    %v440 = vand.u32 2147483647, %v430
    %vm441 = vcmp.eq.f32.partialorder %v440, 8.507059e+37
    %v442 = vand.u32 %v430, 2147483648
    %v443 = vor.u32 1.1754944e-38, %v442
    %v444 = vsel %vm441, %v443, %v439
    %v445 = vmul.f32 1.0, %v444
    %446 = vmatpush.msra.mxu0 0.0
    %447 = vmatpush.msra.mxu0 0.0
    %448 = vmatpush.msra.mxu0 0.0
    %449 = vmatpush.msra.mxu0 0.0
    %450 = vmatpush.msra.mxu0 0.0
    %451 = vmatpush.msra.mxu0 0.0
    %452 = vmatpush.msra.mxu0 0.0
    %453 = vmatpush.msra.mxu0 0.0
    %454 = vmatpush.msra.mxu0 0.0
    %455 = vmatpush.msra.mxu0 0.0
    %456 = vmatpush.msra.mxu0 0.0
    %457 = vmatpush.msra.mxu0 0.0
    %458 = vmatpush.msra.mxu0 %v236
    %459 = vmatpush.msra.mxu0 %v235
    %460 = vmatpush.msra.mxu0 %v234
    %461 = vmatpush.msra.mxu0 %v233
    %462 = vmatmul.f32.gmra.mxu0 %v364
    %v463 = vpop.f32.mrf.mxu0
    %v464 = vadd.f32 %v239, %v463
    %465 = vdwg.mxu0
    %v466 = vmul.f32 %v425, %v464
    %v467 = vadd.f32 %v203, %v466
    %v468 = vtanh.pop %v467
    %v469 = vsub.f32 %v362, %v468
    %v470 = vmul.f32 %v445, %v469
    %v471 = vadd.f32 %v468, %v470
    %v472 = vsel %vm246, %v471, %v362
    %v474 = vsel %vm55, %v472, 0
    %476 = vmatpush.msra.mxu0 0.0
    %477 = vmatpush.msra.mxu0 0.0
    %478 = vmatpush.msra.mxu0 0.0
    %479 = vmatpush.msra.mxu0 0.0
    %480 = vmatpush.msra.mxu0 0.0
    %481 = vmatpush.msra.mxu0 0.0
    %482 = vmatpush.msra.mxu0 0.0
    %483 = vmatpush.msra.mxu0 0.0
    %484 = vmatpush.msra.mxu0 0.0
    %485 = vmatpush.msra.mxu0 0.0
    %486 = vmatpush.msra.mxu0 0.0
    %487 = vmatpush.msra.mxu0 0.0
    %488 = vmatpush.msra.mxu0 %v226
    %489 = vmatpush.msra.mxu0 %v225
    %490 = vmatpush.msra.mxu0 %v224
    %491 = vmatpush.msra.mxu0 %v223
    %492 = vmatmul.f32.gmra.mxu0 %v474
    %v493 = vpop.f32.mrf.mxu0
    %v494 = vadd.f32 0.0, %v493
    %495 = vdwg.mxu0
    %496 = vmatpush.msra.mxu0 0.0
    %497 = vmatpush.msra.mxu0 0.0
    %498 = vmatpush.msra.mxu0 0.0
    %499 = vmatpush.msra.mxu0 0.0
    %500 = vmatpush.msra.mxu0 0.0
    %501 = vmatpush.msra.mxu0 0.0
    %502 = vmatpush.msra.mxu0 0.0
    %503 = vmatpush.msra.mxu0 0.0
    %504 = vmatpush.msra.mxu0 0.0
    %505 = vmatpush.msra.mxu0 0.0
    %506 = vmatpush.msra.mxu0 0.0
    %507 = vmatpush.msra.mxu0 0.0
    %508 = vmatpush.msra.mxu0 %v231
    %509 = vmatpush.msra.mxu0 %v230
    %510 = vmatpush.msra.mxu0 %v229
    %511 = vmatpush.msra.mxu0 %v228
    %512 = vmatmul.f32.gmra.mxu0 %v474
    %v513 = vpop.f32.mrf.mxu0
    %v514 = vadd.f32 0.0, %v513
    %515 = vdwg.mxu0
    %v516 = vadd.f32 %v104, %v494
    %v517 = vxor.u32 %v516, 2147483648
    %v518 = vmul.f32 %v517, 1.442695
    %v519 = vpow.pop %v518
    %v520 = vadd.f32 %v519, 1.0
    %v521 = vrcp.pop %v520
    %v522 = vmul.f32 %v520, %v521
    %v523 = vsub.f32 1.0, %v522
    %v524 = vmul.f32 %v521, %v523
    %v525 = vadd.f32 %v521, %v524
    %vm526 = vweird.f32 %v520
    %vm527 = vweird.f32 %v521
    %vm528 = vmor %vm526, %vm527
    %v529 = vsel %vm528, %v521, %v525
    %v530 = vand.u32 2147483647, %v520
    %vm531 = vcmp.eq.f32.partialorder %v530, 8.507059e+37
    %v532 = vand.u32 %v520, 2147483648
    %v533 = vor.u32 1.1754944e-38, %v532
    %v534 = vsel %vm531, %v533, %v529
    %v535 = vmul.f32 1.0, %v534
    %v536 = vadd.f32 %v155, %v514
    %v537 = vxor.u32 %v536, 2147483648
    %v538 = vmul.f32 %v537, 1.442695
    %v539 = vpow.pop %v538
    %v540 = vadd.f32 %v539, 1.0
    %v541 = vrcp.pop %v540
    %v542 = vmul.f32 %v540, %v541
    %v543 = vsub.f32 1.0, %v542
    %v544 = vmul.f32 %v541, %v543
    %v545 = vadd.f32 %v541, %v544
    %vm546 = vweird.f32 %v540
    %vm547 = vweird.f32 %v541
    %vm548 = vmor %vm546, %vm547
    %v549 = vsel %vm548, %v541, %v545
    %v550 = vand.u32 2147483647, %v540
    %vm551 = vcmp.eq.f32.partialorder %v550, 8.507059e+37
    %v552 = vand.u32 %v540, 2147483648
    %v553 = vor.u32 1.1754944e-38, %v552
    %v554 = vsel %vm551, %v553, %v549
    %v555 = vmul.f32 1.0, %v554
    %556 = vmatpush.msra.mxu0 0.0
    %557 = vmatpush.msra.mxu0 0.0
    %558 = vmatpush.msra.mxu0 0.0
    %559 = vmatpush.msra.mxu0 0.0
    %560 = vmatpush.msra.mxu0 0.0
    %561 = vmatpush.msra.mxu0 0.0
    %562 = vmatpush.msra.mxu0 0.0
    %563 = vmatpush.msra.mxu0 0.0
    %564 = vmatpush.msra.mxu0 0.0
    %565 = vmatpush.msra.mxu0 0.0
    %566 = vmatpush.msra.mxu0 0.0
    %567 = vmatpush.msra.mxu0 0.0
    %568 = vmatpush.msra.mxu0 %v236
    %569 = vmatpush.msra.mxu0 %v235
    %570 = vmatpush.msra.mxu0 %v234
    %571 = vmatpush.msra.mxu0 %v233
    %572 = vmatmul.f32.gmra.mxu0 %v474
    %v573 = vpop.f32.mrf.mxu0
    %v574 = vadd.f32 %v239, %v573
    %575 = vdwg.mxu0
    %v576 = vmul.f32 %v535, %v574
    %v577 = vadd.f32 %v206, %v576
    %v578 = vtanh.pop %v577
    %v579 = vsub.f32 %v472, %v578
    %v580 = vmul.f32 %v555, %v579
    %v581 = vadd.f32 %v578, %v580
    %v582 = vsel %vm247, %v581, %v472
    %v584 = vsel %vm55, %v582, 0
    %586 = vmatpush.msra.mxu0 0.0
    %587 = vmatpush.msra.mxu0 0.0
    %588 = vmatpush.msra.mxu0 0.0
    %589 = vmatpush.msra.mxu0 0.0
    %590 = vmatpush.msra.mxu0 0.0
    %591 = vmatpush.msra.mxu0 0.0
    %592 = vmatpush.msra.mxu0 0.0
    %593 = vmatpush.msra.mxu0 0.0
    %594 = vmatpush.msra.mxu0 0.0
    %595 = vmatpush.msra.mxu0 0.0
    %596 = vmatpush.msra.mxu0 0.0
    %597 = vmatpush.msra.mxu0 0.0
    %598 = vmatpush.msra.mxu0 %v226
    %599 = vmatpush.msra.mxu0 %v225
    %600 = vmatpush.msra.mxu0 %v224
    %601 = vmatpush.msra.mxu0 %v223
    %602 = vmatmul.f32.gmra.mxu0 %v584
    %v603 = vpop.f32.mrf.mxu0
    %v604 = vadd.f32 0.0, %v603
    %605 = vdwg.mxu0
    %606 = vmatpush.msra.mxu0 0.0
    %607 = vmatpush.msra.mxu0 0.0
    %608 = vmatpush.msra.mxu0 0.0
    %609 = vmatpush.msra.mxu0 0.0
    %610 = vmatpush.msra.mxu0 0.0
    %611 = vmatpush.msra.mxu0 0.0
    %612 = vmatpush.msra.mxu0 0.0
    %613 = vmatpush.msra.mxu0 0.0
    %614 = vmatpush.msra.mxu0 0.0
    %615 = vmatpush.msra.mxu0 0.0
    %616 = vmatpush.msra.mxu0 0.0
    %617 = vmatpush.msra.mxu0 0.0
    %618 = vmatpush.msra.mxu0 %v231
    %619 = vmatpush.msra.mxu0 %v230
    %620 = vmatpush.msra.mxu0 %v229
    %621 = vmatpush.msra.mxu0 %v228
    %622 = vmatmul.f32.gmra.mxu0 %v584
    %v623 = vpop.f32.mrf.mxu0
    %v624 = vadd.f32 0.0, %v623
    %625 = vdwg.mxu0
    %v626 = vadd.f32 %v107, %v604
    %v627 = vxor.u32 %v626, 2147483648
    %v628 = vmul.f32 %v627, 1.442695
    %v629 = vpow.pop %v628
    %v630 = vadd.f32 %v629, 1.0
    %v631 = vrcp.pop %v630
    %v632 = vmul.f32 %v630, %v631
    %v633 = vsub.f32 1.0, %v632
    %v634 = vmul.f32 %v631, %v633
    %v635 = vadd.f32 %v631, %v634
    %vm636 = vweird.f32 %v630
    %vm637 = vweird.f32 %v631
    %vm638 = vmor %vm636, %vm637
    %v639 = vsel %vm638, %v631, %v635
    %v640 = vand.u32 2147483647, %v630
    %vm641 = vcmp.eq.f32.partialorder %v640, 8.507059e+37
    %v642 = vand.u32 %v630, 2147483648
    %v643 = vor.u32 1.1754944e-38, %v642
    %v644 = vsel %vm641, %v643, %v639
    %v645 = vmul.f32 1.0, %v644
    %v646 = vadd.f32 %v158, %v624
    %v647 = vxor.u32 %v646, 2147483648
    %v648 = vmul.f32 %v647, 1.442695
    %v649 = vpow.pop %v648
    %v650 = vadd.f32 %v649, 1.0
    %v651 = vrcp.pop %v650
    %v652 = vmul.f32 %v650, %v651
    %v653 = vsub.f32 1.0, %v652
    %v654 = vmul.f32 %v651, %v653
    %v655 = vadd.f32 %v651, %v654
    %vm656 = vweird.f32 %v650
    %vm657 = vweird.f32 %v651
    %vm658 = vmor %vm656, %vm657
    %v659 = vsel %vm658, %v651, %v655
    %v660 = vand.u32 2147483647, %v650
    %vm661 = vcmp.eq.f32.partialorder %v660, 8.507059e+37
    %v662 = vand.u32 %v650, 2147483648
    %v663 = vor.u32 1.1754944e-38, %v662
    %v664 = vsel %vm661, %v663, %v659
    %v665 = vmul.f32 1.0, %v664
    %666 = vmatpush.msra.mxu0 0.0
    %667 = vmatpush.msra.mxu0 0.0
    %668 = vmatpush.msra.mxu0 0.0
    %669 = vmatpush.msra.mxu0 0.0
    %670 = vmatpush.msra.mxu0 0.0
    %671 = vmatpush.msra.mxu0 0.0
    %672 = vmatpush.msra.mxu0 0.0
    %673 = vmatpush.msra.mxu0 0.0
    %674 = vmatpush.msra.mxu0 0.0
    %675 = vmatpush.msra.mxu0 0.0
    %676 = vmatpush.msra.mxu0 0.0
    %677 = vmatpush.msra.mxu0 0.0
    %678 = vmatpush.msra.mxu0 %v236
    %679 = vmatpush.msra.mxu0 %v235
    %680 = vmatpush.msra.mxu0 %v234
    %681 = vmatpush.msra.mxu0 %v233
    %682 = vmatmul.f32.gmra.mxu0 %v584
    %v683 = vpop.f32.mrf.mxu0
    %v684 = vadd.f32 %v239, %v683
    %685 = vdwg.mxu0
    %v686 = vmul.f32 %v645, %v684
    %v687 = vadd.f32 %v209, %v686
    %v688 = vtanh.pop %v687
    %v689 = vsub.f32 %v582, %v688
    %v690 = vmul.f32 %v665, %v689
    %v691 = vadd.f32 %v688, %v690
    %v692 = vsel %vm248, %v691, %v582
    %v694 = vsel %vm55, %v692, 0
    %696 = vmatpush.msra.mxu0 0.0
    %697 = vmatpush.msra.mxu0 0.0
    %698 = vmatpush.msra.mxu0 0.0
    %699 = vmatpush.msra.mxu0 0.0
    %700 = vmatpush.msra.mxu0 0.0
    %701 = vmatpush.msra.mxu0 0.0
    %702 = vmatpush.msra.mxu0 0.0
    %703 = vmatpush.msra.mxu0 0.0
    %704 = vmatpush.msra.mxu0 0.0
    %705 = vmatpush.msra.mxu0 0.0
    %706 = vmatpush.msra.mxu0 0.0
    %707 = vmatpush.msra.mxu0 0.0
    %708 = vmatpush.msra.mxu0 %v226
    %709 = vmatpush.msra.mxu0 %v225
    %710 = vmatpush.msra.mxu0 %v224
    %711 = vmatpush.msra.mxu0 %v223
    %712 = vmatmul.f32.gmra.mxu0 %v694
    %v713 = vpop.f32.mrf.mxu0
    %v714 = vadd.f32 0.0, %v713
    %715 = vdwg.mxu0
    %716 = vmatpush.msra.mxu0 0.0
    %717 = vmatpush.msra.mxu0 0.0
    %718 = vmatpush.msra.mxu0 0.0
    %719 = vmatpush.msra.mxu0 0.0
    %720 = vmatpush.msra.mxu0 0.0
    %721 = vmatpush.msra.mxu0 0.0
    %722 = vmatpush.msra.mxu0 0.0
    %723 = vmatpush.msra.mxu0 0.0
    %724 = vmatpush.msra.mxu0 0.0
    %725 = vmatpush.msra.mxu0 0.0
    %726 = vmatpush.msra.mxu0 0.0
    %727 = vmatpush.msra.mxu0 0.0
    %728 = vmatpush.msra.mxu0 %v231
    %729 = vmatpush.msra.mxu0 %v230
    %730 = vmatpush.msra.mxu0 %v229
    %731 = vmatpush.msra.mxu0 %v228
    %732 = vmatmul.f32.gmra.mxu0 %v694
    %v733 = vpop.f32.mrf.mxu0
    %v734 = vadd.f32 0.0, %v733
    %735 = vdwg.mxu0
    %v736 = vadd.f32 %v110, %v714
    %v737 = vxor.u32 %v736, 2147483648
    %v738 = vmul.f32 %v737, 1.442695
    %v739 = vpow.pop %v738
    %v740 = vadd.f32 %v739, 1.0
    %v741 = vrcp.pop %v740
    %v742 = vmul.f32 %v740, %v741
    %v743 = vsub.f32 1.0, %v742
    %v744 = vmul.f32 %v741, %v743
    %v745 = vadd.f32 %v741, %v744
    %vm746 = vweird.f32 %v740
    %vm747 = vweird.f32 %v741
    %vm748 = vmor %vm746, %vm747
    %v749 = vsel %vm748, %v741, %v745
    %v750 = vand.u32 2147483647, %v740
    %vm751 = vcmp.eq.f32.partialorder %v750, 8.507059e+37
    %v752 = vand.u32 %v740, 2147483648
    %v753 = vor.u32 1.1754944e-38, %v752
    %v754 = vsel %vm751, %v753, %v749
    %v755 = vmul.f32 1.0, %v754
    %v756 = vadd.f32 %v161, %v734
    %v757 = vxor.u32 %v756, 2147483648
    %v758 = vmul.f32 %v757, 1.442695
    %v759 = vpow.pop %v758
    %v760 = vadd.f32 %v759, 1.0
    %v761 = vrcp.pop %v760
    %v762 = vmul.f32 %v760, %v761
    %v763 = vsub.f32 1.0, %v762
    %v764 = vmul.f32 %v761, %v763
    %v765 = vadd.f32 %v761, %v764
    %vm766 = vweird.f32 %v760
    %vm767 = vweird.f32 %v761
    %vm768 = vmor %vm766, %vm767
    %v769 = vsel %vm768, %v761, %v765
    %v770 = vand.u32 2147483647, %v760
    %vm771 = vcmp.eq.f32.partialorder %v770, 8.507059e+37
    %v772 = vand.u32 %v760, 2147483648
    %v773 = vor.u32 1.1754944e-38, %v772
    %v774 = vsel %vm771, %v773, %v769
    %v775 = vmul.f32 1.0, %v774
    %776 = vmatpush.msra.mxu0 0.0
    %777 = vmatpush.msra.mxu0 0.0
    %778 = vmatpush.msra.mxu0 0.0
    %779 = vmatpush.msra.mxu0 0.0
    %780 = vmatpush.msra.mxu0 0.0
    %781 = vmatpush.msra.mxu0 0.0
    %782 = vmatpush.msra.mxu0 0.0
    %783 = vmatpush.msra.mxu0 0.0
    %784 = vmatpush.msra.mxu0 0.0
    %785 = vmatpush.msra.mxu0 0.0
    %786 = vmatpush.msra.mxu0 0.0
    %787 = vmatpush.msra.mxu0 0.0
    %788 = vmatpush.msra.mxu0 %v236
    %789 = vmatpush.msra.mxu0 %v235
    %790 = vmatpush.msra.mxu0 %v234
    %791 = vmatpush.msra.mxu0 %v233
    %792 = vmatmul.f32.gmra.mxu0 %v694
    %v793 = vpop.f32.mrf.mxu0
    %v794 = vadd.f32 %v239, %v793
    %795 = vdwg.mxu0
    %v796 = vmul.f32 %v755, %v794
    %v797 = vadd.f32 %v212, %v796
    %v798 = vtanh.pop %v797
    %v799 = vsub.f32 %v692, %v798
    %v800 = vmul.f32 %v775, %v799
    %v801 = vadd.f32 %v798, %v800
    %v802 = vsel %vm249, %v801, %v692
    %v804 = vsel %vm55, %v802, 0
    %806 = vmatpush.msra.mxu0 0.0
    %807 = vmatpush.msra.mxu0 0.0
    %808 = vmatpush.msra.mxu0 0.0
    %809 = vmatpush.msra.mxu0 0.0
    %810 = vmatpush.msra.mxu0 0.0
    %811 = vmatpush.msra.mxu0 0.0
    %812 = vmatpush.msra.mxu0 0.0
    %813 = vmatpush.msra.mxu0 0.0
    %814 = vmatpush.msra.mxu0 0.0
    %815 = vmatpush.msra.mxu0 0.0
    %816 = vmatpush.msra.mxu0 0.0
    %817 = vmatpush.msra.mxu0 0.0
    %818 = vmatpush.msra.mxu0 %v226
    %819 = vmatpush.msra.mxu0 %v225
    %820 = vmatpush.msra.mxu0 %v224
    %821 = vmatpush.msra.mxu0 %v223
    %822 = vmatmul.f32.gmra.mxu0 %v804
    %v823 = vpop.f32.mrf.mxu0
    %v824 = vadd.f32 0.0, %v823
    %825 = vdwg.mxu0
    %826 = vmatpush.msra.mxu0 0.0
    %827 = vmatpush.msra.mxu0 0.0
    %828 = vmatpush.msra.mxu0 0.0
    %829 = vmatpush.msra.mxu0 0.0
    %830 = vmatpush.msra.mxu0 0.0
    %831 = vmatpush.msra.mxu0 0.0
    %832 = vmatpush.msra.mxu0 0.0
    %833 = vmatpush.msra.mxu0 0.0
    %834 = vmatpush.msra.mxu0 0.0
    %835 = vmatpush.msra.mxu0 0.0
    %836 = vmatpush.msra.mxu0 0.0
    %837 = vmatpush.msra.mxu0 0.0
    %838 = vmatpush.msra.mxu0 %v231
    %839 = vmatpush.msra.mxu0 %v230
    %840 = vmatpush.msra.mxu0 %v229
    %841 = vmatpush.msra.mxu0 %v228
    %842 = vmatmul.f32.gmra.mxu0 %v804
    %v843 = vpop.f32.mrf.mxu0
    %v844 = vadd.f32 0.0, %v843
    %845 = vdwg.mxu0
    %v846 = vadd.f32 %v113, %v824
    %v847 = vxor.u32 %v846, 2147483648
    %v848 = vmul.f32 %v847, 1.442695
    %v849 = vpow.pop %v848
    %v850 = vadd.f32 %v849, 1.0
    %v851 = vrcp.pop %v850
    %v852 = vmul.f32 %v850, %v851
    %v853 = vsub.f32 1.0, %v852
    %v854 = vmul.f32 %v851, %v853
    %v855 = vadd.f32 %v851, %v854
    %vm856 = vweird.f32 %v850
    %vm857 = vweird.f32 %v851
    %vm858 = vmor %vm856, %vm857
    %v859 = vsel %vm858, %v851, %v855
    %v860 = vand.u32 2147483647, %v850
    %vm861 = vcmp.eq.f32.partialorder %v860, 8.507059e+37
    %v862 = vand.u32 %v850, 2147483648
    %v863 = vor.u32 1.1754944e-38, %v862
    %v864 = vsel %vm861, %v863, %v859
    %v865 = vmul.f32 1.0, %v864
    %v866 = vadd.f32 %v164, %v844
    %v867 = vxor.u32 %v866, 2147483648
    %v868 = vmul.f32 %v867, 1.442695
    %v869 = vpow.pop %v868
    %v870 = vadd.f32 %v869, 1.0
    %v871 = vrcp.pop %v870
    %v872 = vmul.f32 %v870, %v871
    %v873 = vsub.f32 1.0, %v872
    %v874 = vmul.f32 %v871, %v873
    %v875 = vadd.f32 %v871, %v874
    %vm876 = vweird.f32 %v870
    %vm877 = vweird.f32 %v871
    %vm878 = vmor %vm876, %vm877
    %v879 = vsel %vm878, %v871, %v875
    %v880 = vand.u32 2147483647, %v870
    %vm881 = vcmp.eq.f32.partialorder %v880, 8.507059e+37
    %v882 = vand.u32 %v870, 2147483648
    %v883 = vor.u32 1.1754944e-38, %v882
    %v884 = vsel %vm881, %v883, %v879
    %v885 = vmul.f32 1.0, %v884
    %886 = vmatpush.msra.mxu0 0.0
    %887 = vmatpush.msra.mxu0 0.0
    %888 = vmatpush.msra.mxu0 0.0
    %889 = vmatpush.msra.mxu0 0.0
    %890 = vmatpush.msra.mxu0 0.0
    %891 = vmatpush.msra.mxu0 0.0
    %892 = vmatpush.msra.mxu0 0.0
    %893 = vmatpush.msra.mxu0 0.0
    %894 = vmatpush.msra.mxu0 0.0
    %895 = vmatpush.msra.mxu0 0.0
    %896 = vmatpush.msra.mxu0 0.0
    %897 = vmatpush.msra.mxu0 0.0
    %898 = vmatpush.msra.mxu0 %v236
    %899 = vmatpush.msra.mxu0 %v235
    %900 = vmatpush.msra.mxu0 %v234
    %901 = vmatpush.msra.mxu0 %v233
    %902 = vmatmul.f32.gmra.mxu0 %v804
    %v903 = vpop.f32.mrf.mxu0
    %v904 = vadd.f32 %v239, %v903
    %905 = vdwg.mxu0
    %v906 = vmul.f32 %v865, %v904
    %v907 = vadd.f32 %v215, %v906
    %v908 = vtanh.pop %v907
    %v909 = vsub.f32 %v802, %v908
    %v910 = vmul.f32 %v885, %v909
    %v911 = vadd.f32 %v908, %v910
    %v912 = vsel %vm250, %v911, %v802
    %v914 = vsel %vm55, %v912, 0
    %916 = vmatpush.msra.mxu0 0.0
    %917 = vmatpush.msra.mxu0 0.0
    %918 = vmatpush.msra.mxu0 0.0
    %919 = vmatpush.msra.mxu0 0.0
    %920 = vmatpush.msra.mxu0 0.0
    %921 = vmatpush.msra.mxu0 0.0
    %922 = vmatpush.msra.mxu0 0.0
    %923 = vmatpush.msra.mxu0 0.0
    %924 = vmatpush.msra.mxu0 0.0
    %925 = vmatpush.msra.mxu0 0.0
    %926 = vmatpush.msra.mxu0 0.0
    %927 = vmatpush.msra.mxu0 0.0
    %928 = vmatpush.msra.mxu0 %v226
    %929 = vmatpush.msra.mxu0 %v225
    %930 = vmatpush.msra.mxu0 %v224
    %931 = vmatpush.msra.mxu0 %v223
    %932 = vmatmul.f32.gmra.mxu0 %v914
    %v933 = vpop.f32.mrf.mxu0
    %v934 = vadd.f32 0.0, %v933
    %935 = vdwg.mxu0
    %936 = vmatpush.msra.mxu0 0.0
    %937 = vmatpush.msra.mxu0 0.0
    %938 = vmatpush.msra.mxu0 0.0
    %939 = vmatpush.msra.mxu0 0.0
    %940 = vmatpush.msra.mxu0 0.0
    %941 = vmatpush.msra.mxu0 0.0
    %942 = vmatpush.msra.mxu0 0.0
    %943 = vmatpush.msra.mxu0 0.0
    %944 = vmatpush.msra.mxu0 0.0
    %945 = vmatpush.msra.mxu0 0.0
    %946 = vmatpush.msra.mxu0 0.0
    %947 = vmatpush.msra.mxu0 0.0
    %948 = vmatpush.msra.mxu0 %v231
    %949 = vmatpush.msra.mxu0 %v230
    %950 = vmatpush.msra.mxu0 %v229
    %951 = vmatpush.msra.mxu0 %v228
    %952 = vmatmul.f32.gmra.mxu0 %v914
    %v953 = vpop.f32.mrf.mxu0
    %v954 = vadd.f32 0.0, %v953
    %955 = vdwg.mxu0
    %v956 = vadd.f32 %v116, %v934
    %v957 = vxor.u32 %v956, 2147483648
    %v958 = vmul.f32 %v957, 1.442695
    %v959 = vpow.pop %v958
    %v960 = vadd.f32 %v959, 1.0
    %v961 = vrcp.pop %v960
    %v962 = vmul.f32 %v960, %v961
    %v963 = vsub.f32 1.0, %v962
    %v964 = vmul.f32 %v961, %v963
    %v965 = vadd.f32 %v961, %v964
    %vm966 = vweird.f32 %v960
    %vm967 = vweird.f32 %v961
    %vm968 = vmor %vm966, %vm967
    %v969 = vsel %vm968, %v961, %v965
    %v970 = vand.u32 2147483647, %v960
    %vm971 = vcmp.eq.f32.partialorder %v970, 8.507059e+37
    %v972 = vand.u32 %v960, 2147483648
    %v973 = vor.u32 1.1754944e-38, %v972
    %v974 = vsel %vm971, %v973, %v969
    %v975 = vmul.f32 1.0, %v974
    %v976 = vadd.f32 %v167, %v954
    %v977 = vxor.u32 %v976, 2147483648
    %v978 = vmul.f32 %v977, 1.442695
    %v979 = vpow.pop %v978
    %v980 = vadd.f32 %v979, 1.0
    %v981 = vrcp.pop %v980
    %v982 = vmul.f32 %v980, %v981
    %v983 = vsub.f32 1.0, %v982
    %v984 = vmul.f32 %v981, %v983
    %v985 = vadd.f32 %v981, %v984
    %vm986 = vweird.f32 %v980
    %vm987 = vweird.f32 %v981
    %vm988 = vmor %vm986, %vm987
    %v989 = vsel %vm988, %v981, %v985
    %v990 = vand.u32 2147483647, %v980
    %vm991 = vcmp.eq.f32.partialorder %v990, 8.507059e+37
    %v992 = vand.u32 %v980, 2147483648
    %v993 = vor.u32 1.1754944e-38, %v992
    %v994 = vsel %vm991, %v993, %v989
    %v995 = vmul.f32 1.0, %v994
    %996 = vmatpush.msra.mxu0 0.0
    %997 = vmatpush.msra.mxu0 0.0
    %998 = vmatpush.msra.mxu0 0.0
    %999 = vmatpush.msra.mxu0 0.0
    %1000 = vmatpush.msra.mxu0 0.0
    %1001 = vmatpush.msra.mxu0 0.0
    %1002 = vmatpush.msra.mxu0 0.0
    %1003 = vmatpush.msra.mxu0 0.0
    %1004 = vmatpush.msra.mxu0 0.0
    %1005 = vmatpush.msra.mxu0 0.0
    %1006 = vmatpush.msra.mxu0 0.0
    %1007 = vmatpush.msra.mxu0 0.0
    %1008 = vmatpush.msra.mxu0 %v236
    %1009 = vmatpush.msra.mxu0 %v235
    %1010 = vmatpush.msra.mxu0 %v234
    %1011 = vmatpush.msra.mxu0 %v233
    %1012 = vmatmul.f32.gmra.mxu0 %v914
    %v1013 = vpop.f32.mrf.mxu0
    %v1014 = vadd.f32 %v239, %v1013
    %1015 = vdwg.mxu0
    %v1016 = vmul.f32 %v975, %v1014
    %v1017 = vadd.f32 %v218, %v1016
    %v1018 = vtanh.pop %v1017
    %v1019 = vsub.f32 %v912, %v1018
    %v1020 = vmul.f32 %v995, %v1019
    %v1021 = vadd.f32 %v1018, %v1020
    %v1022 = vsel %vm251, %v1021, %v912
    %v1024 = vsel %vm55, %v1022, 0
    %1026 = vmatpush.msra.mxu0 0.0
    %1027 = vmatpush.msra.mxu0 0.0
    %1028 = vmatpush.msra.mxu0 0.0
    %1029 = vmatpush.msra.mxu0 0.0
    %1030 = vmatpush.msra.mxu0 0.0
    %1031 = vmatpush.msra.mxu0 0.0
    %1032 = vmatpush.msra.mxu0 0.0
    %1033 = vmatpush.msra.mxu0 0.0
    %1034 = vmatpush.msra.mxu0 0.0
    %1035 = vmatpush.msra.mxu0 0.0
    %1036 = vmatpush.msra.mxu0 0.0
    %1037 = vmatpush.msra.mxu0 0.0
    %1038 = vmatpush.msra.mxu0 %v226
    %1039 = vmatpush.msra.mxu0 %v225
    %1040 = vmatpush.msra.mxu0 %v224
    %1041 = vmatpush.msra.mxu0 %v223
    %1042 = vmatmul.f32.gmra.mxu0 %v1024
    %v1043 = vpop.f32.mrf.mxu0
    %v1044 = vadd.f32 0.0, %v1043
    %1045 = vdwg.mxu0
    %1046 = vmatpush.msra.mxu0 0.0
    %1047 = vmatpush.msra.mxu0 0.0
    %1048 = vmatpush.msra.mxu0 0.0
    %1049 = vmatpush.msra.mxu0 0.0
    %1050 = vmatpush.msra.mxu0 0.0
    %1051 = vmatpush.msra.mxu0 0.0
    %1052 = vmatpush.msra.mxu0 0.0
    %1053 = vmatpush.msra.mxu0 0.0
    %1054 = vmatpush.msra.mxu0 0.0
    %1055 = vmatpush.msra.mxu0 0.0
    %1056 = vmatpush.msra.mxu0 0.0
    %1057 = vmatpush.msra.mxu0 0.0
    %1058 = vmatpush.msra.mxu0 %v231
    %1059 = vmatpush.msra.mxu0 %v230
    %1060 = vmatpush.msra.mxu0 %v229
    %1061 = vmatpush.msra.mxu0 %v228
    %1062 = vmatmul.f32.gmra.mxu0 %v1024
    %v1063 = vpop.f32.mrf.mxu0
    %v1064 = vadd.f32 0.0, %v1063
    %1065 = vdwg.mxu0
    %v1066 = vadd.f32 %v119, %v1044
    %v1067 = vxor.u32 %v1066, 2147483648
    %v1068 = vmul.f32 %v1067, 1.442695
    %v1069 = vpow.pop %v1068
    %v1070 = vadd.f32 %v1069, 1.0
    %v1071 = vrcp.pop %v1070
    %v1072 = vmul.f32 %v1070, %v1071
    %v1073 = vsub.f32 1.0, %v1072
    %v1074 = vmul.f32 %v1071, %v1073
    %v1075 = vadd.f32 %v1071, %v1074
    %vm1076 = vweird.f32 %v1070
    %vm1077 = vweird.f32 %v1071
    %vm1078 = vmor %vm1076, %vm1077
    %v1079 = vsel %vm1078, %v1071, %v1075
    %v1080 = vand.u32 2147483647, %v1070
    %vm1081 = vcmp.eq.f32.partialorder %v1080, 8.507059e+37
    %v1082 = vand.u32 %v1070, 2147483648
    %v1083 = vor.u32 1.1754944e-38, %v1082
    %v1084 = vsel %vm1081, %v1083, %v1079
    %v1085 = vmul.f32 1.0, %v1084
    %v1086 = vadd.f32 %v170, %v1064
    %v1087 = vxor.u32 %v1086, 2147483648
    %v1088 = vmul.f32 %v1087, 1.442695
    %v1089 = vpow.pop %v1088
    %v1090 = vadd.f32 %v1089, 1.0
    %v1091 = vrcp.pop %v1090
    %v1092 = vmul.f32 %v1090, %v1091
    %v1093 = vsub.f32 1.0, %v1092
    %v1094 = vmul.f32 %v1091, %v1093
    %v1095 = vadd.f32 %v1091, %v1094
    %vm1096 = vweird.f32 %v1090
    %vm1097 = vweird.f32 %v1091
    %vm1098 = vmor %vm1096, %vm1097
    %v1099 = vsel %vm1098, %v1091, %v1095
    %v1100 = vand.u32 2147483647, %v1090
    %vm1101 = vcmp.eq.f32.partialorder %v1100, 8.507059e+37
    %v1102 = vand.u32 %v1090, 2147483648
    %v1103 = vor.u32 1.1754944e-38, %v1102
    %v1104 = vsel %vm1101, %v1103, %v1099
    %v1105 = vmul.f32 1.0, %v1104
    %1106 = vmatpush.msra.mxu0 0.0
    %1107 = vmatpush.msra.mxu0 0.0
    %1108 = vmatpush.msra.mxu0 0.0
    %1109 = vmatpush.msra.mxu0 0.0
    %1110 = vmatpush.msra.mxu0 0.0
    %1111 = vmatpush.msra.mxu0 0.0
    %1112 = vmatpush.msra.mxu0 0.0
    %1113 = vmatpush.msra.mxu0 0.0
    %1114 = vmatpush.msra.mxu0 0.0
    %1115 = vmatpush.msra.mxu0 0.0
    %1116 = vmatpush.msra.mxu0 0.0
    %1117 = vmatpush.msra.mxu0 0.0
    %1118 = vmatpush.msra.mxu0 %v236
    %1119 = vmatpush.msra.mxu0 %v235
    %1120 = vmatpush.msra.mxu0 %v234
    %1121 = vmatpush.msra.mxu0 %v233
    %1122 = vmatmul.f32.gmra.mxu0 %v1024
    %v1123 = vpop.f32.mrf.mxu0
    %v1124 = vadd.f32 %v239, %v1123
    %1125 = vdwg.mxu0
    %v1126 = vmul.f32 %v1085, %v1124
    %v1127 = vadd.f32 %v221, %v1126
    %v1128 = vtanh.pop %v1127
    %v1129 = vsub.f32 %v1022, %v1128
    %v1130 = vmul.f32 %v1105, %v1129
    %v1131 = vadd.f32 %v1128, %v1130
    %v1132 = vsel %vm252, %v1131, %v1022
    %1133 = vst.msk [vmem:[%s6] sm:$0xff] %vm55, %v1132
    // Predicated region
    $region30: #{gru_layer0_final.1} parent=1 // pred_check
      _
    $region31: #{gru_layer0_final.1} parent=1 // pred_check_branch
      %1135 = sbr.rel (0) target = $region33
    $region32: #{gru_layer0_final.1} parent=1 // pred_region
      _
    $region33: #{gru_layer0_final.1} parent=1 // pred_fallthru
      _
    // Predicated region
    $region34: #{gru_layer0_final.1} parent=1 // pred_check
      _
    $region35: #{gru_layer0_final.1} parent=1 // pred_check_branch
      %1137 = sbr.rel (0) target = $region37
    $region36: #{gru_layer0_final.1} parent=1 // pred_region
      _
    $region37: #{gru_layer0_final.1} parent=1 // pred_fallthru
      _
    %1138 = vsyncpa [#allocation3], 1

</llo_original>
